<compile_context>
chip_gen: v7x
topology: tpu7x:2x2x1
jax: 0.10.0
libtpu: 0.0.40
codegen_flags: <defaults>
</compile_context>

<pallas_src>
import functools

import jax
import jax.numpy as jnp
from jax import lax
from jax.experimental import pallas as pl
from jax.experimental.pallas import tpu as pltpu


def _shift_t(a, d, t_pad):
    """b[t, f] = a[(t + d) mod t_pad, f] — static sublane rotation (XLU slot)."""
    if d == 0:
        return a
    return pltpu.roll(a, (-d) % t_pad, 0)


def fra_kernel(x_ref, w1_ref, b1_ref, pa_ref, w2_ref, b2_ref, o_ref,
               *, C, T, T_PAD, OUT):
    f_tile = x_ref.shape[-1]
    alpha = pa_ref[0]  # single shared PReLU slope (nn.PReLU() default)

    # ss = sum_c x^2  (the 1/C of the channel mean is folded into w1 in the wrapper).
    # Pairwise tree reduction keeps the VALU add chain short for large C.
    parts = [x_ref[0, c].astype(jnp.float32) for c in range(C)]
    parts = [p * p for p in parts]
    while len(parts) > 1:
        nxt = [parts[i] + parts[i + 1] for i in range(0, len(parts) - 1, 2)]
        if len(parts) & 1:
            nxt.append(parts[-1])
        parts = nxt
    ss = parts[0]                                      # (T_PAD, f_tile); rows >= T are 0

    # af must be exactly zero on the whole padded tail [T, T_PAD) (covers both the
    # forward halo [T, T+4) and the wraparound window [T_PAD-4, T_PAD)).
    valid = lax.broadcasted_iota(jnp.int32, (T_PAD, f_tile), 0) < T

    # --- conv1: Conv2d(1, OUT, (3,1), padding=(1,0)) + PReLU ----------------------
    ss_sh = [_shift_t(ss, d, T_PAD) for d in (-1, 0, 1)]      # offsets t-1, t, t+1
    af = []
    for o in range(OUT):
        a = (w1_ref[3 * o + 0] * ss_sh[0]
             + w1_ref[3 * o + 1] * ss_sh[1]
             + w1_ref[3 * o + 2] * ss_sh[2]
             + b1_ref[o])                                     # scalar splat bias
        a = jnp.where(a >= 0, a, alpha * a)                   # PReLU
        af.append(jnp.where(valid, a, 0.0))                   # zero the padded tail

    # --- conv2: Conv2d(OUT, OUT, (5,1), padding=(4,0), dilation=(2,1)) + Sigmoid --
    # Only one shifted map live at a time; OUT accumulators carried.
    acc = [None] * OUT
    for k in range(5):
        d = 2 * k - 4                                         # offsets -4,-2,0,2,4
        for i in range(OUT):
            sh = _shift_t(af[i], d, T_PAD)
            for o in range(OUT):
                term = w2_ref[(o * OUT + i) * 5 + k] * sh
                acc[o] = term if acc[o] is None else acc[o] + term

    # Per-channel stores (no stacked temporary); only the first T rows are written.
    for o in range(OUT):
        o_ref[0, o] = jax.nn.sigmoid(acc[o][:T] + b2_ref[o]).astype(o_ref.dtype)


def _choose_f_tiling(F, C, OUT, T_PAD, budget_bytes=12 * 1024 * 1024):
    """Pick an F (lane) tile from a conservative VMEM working-set estimate.

    Per lane column (f32 bytes): double-buffered input + output blocks
    (2*(C+OUT)) plus live slab temporaries (~2*OUT + 6).  Budget kept v7x-safe
    (64 MiB physical VMEM per TC)."""
    per_col = (2 * (C + OUT) + (2 * OUT + 6)) * T_PAD * 4
    max_cols = max(128, budget_bytes // max(per_col, 1))
    if F <= max_cols:
        return F, F, 1                       # (F_padded, f_tile, n_f) — full F, no pad
    f_tile = max(128, (max_cols // 128) * 128)
    f_padded = -(-F // f_tile) * f_tile      # pad F up so every grid block is full
    return f_padded, f_tile, f_padded // f_tile


def fra_forward(x, w1, b1, alpha, w2, b2):
    B, C, T, F = x.shape
    OUT = b1.shape[0]

    # Pad T to the next multiple of 8 with at least a 4-row halo (reach of the
    # dilated conv).  No transposes: F stays on lanes, T on sublanes.
    T_PAD = -(-(T + 4) // 8) * 8
    F_PAD, f_tile, n_f = _choose_f_tiling(F, C, OUT, T_PAD)

    x_p = x
    if (T_PAD != T) or (F_PAD != F):
        x_p = jnp.pad(x, ((0, 0), (0, 0), (0, T_PAD - T), (0, F_PAD - F)))

    kernel = functools.partial(fra_kernel, C=C, T=T, T_PAD=T_PAD, OUT=OUT)
    smem = pl.BlockSpec(memory_space=pltpu.MemorySpace.SMEM)

    out = pl.pallas_call(
        kernel,
        out_shape=jax.ShapeDtypeStruct((B, OUT, T, F_PAD), x.dtype),
        grid=(B, n_f),
        in_specs=[
            pl.BlockSpec((1, C, T_PAD, f_tile), lambda b, f: (b, 0, 0, f)),  # x (T zero-padded)
            smem,   # w1 / C, flattened  (OUT*3,)
            smem,   # b1                 (OUT,)
            smem,   # prelu alpha        (1,)
            smem,   # w2, flattened      (OUT*OUT*5,)
            smem,   # b2                 (OUT,)
        ],
        out_specs=pl.BlockSpec((1, OUT, T, f_tile), lambda b, f: (b, 0, 0, f)),
        compiler_params=pltpu.CompilerParams(
            dimension_semantics=("parallel", "parallel"),
            vmem_limit_bytes=48 * 1024 * 1024,
        ),
    )(
        x_p,
        (w1.reshape(OUT, 3) / C).reshape(-1).astype(jnp.float32),  # fold 1/C of the mean
        b1.astype(jnp.float32),
        jnp.asarray([alpha], jnp.float32),
        w2.reshape(-1).astype(jnp.float32),
        b2.astype(jnp.float32),
    )
    return out if F_PAD == F else out[..., :F]


def fra_reference(x, w1, b1, alpha, w2, b2):
    """Pure-JAX reference using lax.conv_general_dilated (NCHW)."""
    zf = jnp.mean(x * x, axis=1, keepdims=True)                      # (B,1,T,F)
    a = lax.conv_general_dilated(
        zf, w1, window_strides=(1, 1), padding=((1, 1), (0, 0)),
        dimension_numbers=("NCHW", "OIHW", "NCHW"))
    a = a + b1.reshape(1, -1, 1, 1)
    a = jnp.where(a >= 0, a, alpha * a)                              # PReLU
    a2 = lax.conv_general_dilated(
        a, w2, window_strides=(1, 1), padding=((4, 4), (0, 0)),
        rhs_dilation=(2, 1), dimension_numbers=("NCHW", "OIHW", "NCHW"))
    a2 = a2 + b2.reshape(1, -1, 1, 1)
    return jax.nn.sigmoid(a2)


if __name__ == "__main__":
    B, C, T, F = 2, 4, 16, 16
    OUT = C  # out_channels == C so output shape matches (B, C, T, F)

    key = jax.random.PRNGKey(0)
    k1, k2, k3, k4, k5 = jax.random.split(key, 5)
    x = jax.random.normal(k1, (B, C, T, F), jnp.float32)
    w1 = jax.random.normal(k2, (OUT, 1, 3, 1), jnp.float32) * 0.3    # Conv2d(1, OUT, (3,1))
    b1 = jax.random.normal(k3, (OUT,), jnp.float32) * 0.1
    w2 = jax.random.normal(k4, (OUT, OUT, 5, 1), jnp.float32) * 0.2  # Conv2d(OUT, OUT, (5,1))
    b2 = jax.random.normal(k5, (OUT,), jnp.float32) * 0.1
    alpha = 0.25                                                     # nn.PReLU() default init

    out = jax.block_until_ready(fra_forward(x, w1, b1, alpha, w2, b2))
    ref = jax.block_until_ready(fra_reference(x, w1, b1, alpha, w2, b2))

    assert out.shape == (B, OUT, T, F), out.shape
    assert jnp.allclose(out, ref, rtol=1e-5, atol=1e-5), float(jnp.max(jnp.abs(out - ref)))

    print("KERNEL_OK")
</pallas_src>

<mosaic_0001>
module attributes {stable_mosaic.version = 11 : i64} {
  func.func @fra_kernel(%arg0: i32, %arg1: i32, %arg2: memref<1x4x24x16xf32, #tpu.memory_space<vmem>>, %arg3: memref<12xf32, #tpu.memory_space<smem>>, %arg4: memref<4xf32, #tpu.memory_space<smem>>, %arg5: memref<1xf32, #tpu.memory_space<smem>>, %arg6: memref<80xf32, #tpu.memory_space<smem>>, %arg7: memref<4xf32, #tpu.memory_space<smem>>, %arg8: memref<1x4x16x16xf32, #tpu.memory_space<vmem>>) attributes {dimension_semantics = [#tpu.dimension_semantics<parallel>, #tpu.dimension_semantics<parallel>], iteration_bounds = array<i64: 2, 1>, scalar_prefetch = 0 : i64, scratch_operands = 0 : i64, tpu.core_type = #tpu.core_type<tc>, window_params = [{transform_indices = @transform_0, window_bounds = array<i64: 1, 4, 24, 16>}, {transform_indices = @transform_1, window_bounds = array<i64: 12>}, {transform_indices = @transform_2, window_bounds = array<i64: 4>}, {transform_indices = @transform_3, window_bounds = array<i64: 1>}, {transform_indices = @transform_4, window_bounds = array<i64: 80>}, {transform_indices = @transform_5, window_bounds = array<i64: 4>}, {transform_indices = @transform_6, window_bounds = array<i64: 1, 4, 16, 16>}]} {
    %c0 = arith.constant 0 : index
    %0 = memref.load %arg5[%c0] : memref<1xf32, #tpu.memory_space<smem>>
    %c0_0 = arith.constant 0 : index
    %c0_1 = arith.constant 0 : index
    %c0_2 = arith.constant 0 : index
    %c0_3 = arith.constant 0 : index
    %1 = vector.load %arg2[%c0_0, %c0_1, %c0_2, %c0_3] : memref<1x4x24x16xf32, #tpu.memory_space<vmem>>, vector<1x1x24x16xf32>
    %2 = vector.shape_cast %1 : vector<1x1x24x16xf32> to vector<24x16xf32>
    %c0_4 = arith.constant 0 : index
    %c1 = arith.constant 1 : index
    %c0_5 = arith.constant 0 : index
    %c0_6 = arith.constant 0 : index
    %3 = vector.load %arg2[%c0_4, %c1, %c0_5, %c0_6] : memref<1x4x24x16xf32, #tpu.memory_space<vmem>>, vector<1x1x24x16xf32>
    %4 = vector.shape_cast %3 : vector<1x1x24x16xf32> to vector<24x16xf32>
    %c0_7 = arith.constant 0 : index
    %c2 = arith.constant 2 : index
    %c0_8 = arith.constant 0 : index
    %c0_9 = arith.constant 0 : index
    %5 = vector.load %arg2[%c0_7, %c2, %c0_8, %c0_9] : memref<1x4x24x16xf32, #tpu.memory_space<vmem>>, vector<1x1x24x16xf32>
    %6 = vector.shape_cast %5 : vector<1x1x24x16xf32> to vector<24x16xf32>
    %c0_10 = arith.constant 0 : index
    %c3 = arith.constant 3 : index
    %c0_11 = arith.constant 0 : index
    %c0_12 = arith.constant 0 : index
    %7 = vector.load %arg2[%c0_10, %c3, %c0_11, %c0_12] : memref<1x4x24x16xf32, #tpu.memory_space<vmem>>, vector<1x1x24x16xf32>
    %8 = vector.shape_cast %7 : vector<1x1x24x16xf32> to vector<24x16xf32>
    %9 = arith.mulf %2, %2 : vector<24x16xf32>
    %10 = arith.mulf %4, %4 : vector<24x16xf32>
    %11 = arith.mulf %6, %6 : vector<24x16xf32>
    %12 = arith.mulf %8, %8 : vector<24x16xf32>
    %13 = arith.addf %9, %10 : vector<24x16xf32>
    %14 = arith.addf %11, %12 : vector<24x16xf32>
    %15 = arith.addf %13, %14 : vector<24x16xf32>
    %16 = tpu.iota {dimensions = array<i32: 0>} : vector<24x16xi32>
    %c16_i32 = arith.constant 16 : i32
    %17 = vector.broadcast %c16_i32 : i32 to vector<24x16xi32>
    %18 = arith.cmpi slt, %16, %17 : vector<24x16xi32>
    %c1_i32 = arith.constant 1 : i32
    %19 = tpu.dynamic_rotate %15 by %c1_i32 dim 0 : vector<24x16xf32>, i32 -> vector<24x16xf32>
    %c23_i32 = arith.constant 23 : i32
    %20 = tpu.dynamic_rotate %15 by %c23_i32 dim 0 : vector<24x16xf32>, i32 -> vector<24x16xf32>
    %c0_13 = arith.constant 0 : index
    %21 = memref.load %arg3[%c0_13] : memref<12xf32, #tpu.memory_space<smem>>
    %22 = vector.broadcast %21 : f32 to vector<24x16xf32>
    %23 = arith.mulf %22, %19 : vector<24x16xf32>
    %c1_14 = arith.constant 1 : index
    %24 = memref.load %arg3[%c1_14] : memref<12xf32, #tpu.memory_space<smem>>
    %25 = vector.broadcast %24 : f32 to vector<24x16xf32>
    %26 = arith.mulf %25, %15 : vector<24x16xf32>
    %27 = arith.addf %23, %26 : vector<24x16xf32>
    %c2_15 = arith.constant 2 : index
    %28 = memref.load %arg3[%c2_15] : memref<12xf32, #tpu.memory_space<smem>>
    %29 = vector.broadcast %28 : f32 to vector<24x16xf32>
    %30 = arith.mulf %29, %20 : vector<24x16xf32>
    %31 = arith.addf %27, %30 : vector<24x16xf32>
    %c0_16 = arith.constant 0 : index
    %32 = memref.load %arg4[%c0_16] : memref<4xf32, #tpu.memory_space<smem>>
    %33 = vector.broadcast %32 : f32 to vector<24x16xf32>
    %34 = arith.addf %31, %33 : vector<24x16xf32>
    %cst = arith.constant 0.000000e+00 : f32
    %35 = vector.broadcast %cst : f32 to vector<24x16xf32>
    %36 = arith.cmpf oge, %34, %35 : vector<24x16xf32>
    %37 = vector.broadcast %0 : f32 to vector<24x16xf32>
    %38 = arith.mulf %37, %34 : vector<24x16xf32>
    %39 = arith.select %36, %34, %38 : vector<24x16xi1>, vector<24x16xf32>
    %cst_17 = arith.constant 0.000000e+00 : f32
    %40 = vector.broadcast %cst_17 : f32 to vector<24x16xf32>
    %41 = arith.select %18, %39, %40 : vector<24x16xi1>, vector<24x16xf32>
    %c3_18 = arith.constant 3 : index
    %42 = memref.load %arg3[%c3_18] : memref<12xf32, #tpu.memory_space<smem>>
    %43 = vector.broadcast %42 : f32 to vector<24x16xf32>
    %44 = arith.mulf %43, %19 : vector<24x16xf32>
    %c4 = arith.constant 4 : index
    %45 = memref.load %arg3[%c4] : memref<12xf32, #tpu.memory_space<smem>>
    %46 = vector.broadcast %45 : f32 to vector<24x16xf32>
    %47 = arith.mulf %46, %15 : vector<24x16xf32>
    %48 = arith.addf %44, %47 : vector<24x16xf32>
    %c5 = arith.constant 5 : index
    %49 = memref.load %arg3[%c5] : memref<12xf32, #tpu.memory_space<smem>>
    %50 = vector.broadcast %49 : f32 to vector<24x16xf32>
    %51 = arith.mulf %50, %20 : vector<24x16xf32>
    %52 = arith.addf %48, %51 : vector<24x16xf32>
    %c1_19 = arith.constant 1 : index
    %53 = memref.load %arg4[%c1_19] : memref<4xf32, #tpu.memory_space<smem>>
    %54 = vector.broadcast %53 : f32 to vector<24x16xf32>
    %55 = arith.addf %52, %54 : vector<24x16xf32>
    %cst_20 = arith.constant 0.000000e+00 : f32
    %56 = vector.broadcast %cst_20 : f32 to vector<24x16xf32>
    %57 = arith.cmpf oge, %55, %56 : vector<24x16xf32>
    %58 = vector.broadcast %0 : f32 to vector<24x16xf32>
    %59 = arith.mulf %58, %55 : vector<24x16xf32>
    %60 = arith.select %57, %55, %59 : vector<24x16xi1>, vector<24x16xf32>
    %cst_21 = arith.constant 0.000000e+00 : f32
    %61 = vector.broadcast %cst_21 : f32 to vector<24x16xf32>
    %62 = arith.select %18, %60, %61 : vector<24x16xi1>, vector<24x16xf32>
    %c6 = arith.constant 6 : index
    %63 = memref.load %arg3[%c6] : memref<12xf32, #tpu.memory_space<smem>>
    %64 = vector.broadcast %63 : f32 to vector<24x16xf32>
    %65 = arith.mulf %64, %19 : vector<24x16xf32>
    %c7 = arith.constant 7 : index
    %66 = memref.load %arg3[%c7] : memref<12xf32, #tpu.memory_space<smem>>
    %67 = vector.broadcast %66 : f32 to vector<24x16xf32>
    %68 = arith.mulf %67, %15 : vector<24x16xf32>
    %69 = arith.addf %65, %68 : vector<24x16xf32>
    %c8 = arith.constant 8 : index
    %70 = memref.load %arg3[%c8] : memref<12xf32, #tpu.memory_space<smem>>
    %71 = vector.broadcast %70 : f32 to vector<24x16xf32>
    %72 = arith.mulf %71, %20 : vector<24x16xf32>
    %73 = arith.addf %69, %72 : vector<24x16xf32>
    %c2_22 = arith.constant 2 : index
    %74 = memref.load %arg4[%c2_22] : memref<4xf32, #tpu.memory_space<smem>>
    %75 = vector.broadcast %74 : f32 to vector<24x16xf32>
    %76 = arith.addf %73, %75 : vector<24x16xf32>
    %cst_23 = arith.constant 0.000000e+00 : f32
    %77 = vector.broadcast %cst_23 : f32 to vector<24x16xf32>
    %78 = arith.cmpf oge, %76, %77 : vector<24x16xf32>
    %79 = vector.broadcast %0 : f32 to vector<24x16xf32>
    %80 = arith.mulf %79, %76 : vector<24x16xf32>
    %81 = arith.select %78, %76, %80 : vector<24x16xi1>, vector<24x16xf32>
    %cst_24 = arith.constant 0.000000e+00 : f32
    %82 = vector.broadcast %cst_24 : f32 to vector<24x16xf32>
    %83 = arith.select %18, %81, %82 : vector<24x16xi1>, vector<24x16xf32>
    %c9 = arith.constant 9 : index
    %84 = memref.load %arg3[%c9] : memref<12xf32, #tpu.memory_space<smem>>
    %85 = vector.broadcast %84 : f32 to vector<24x16xf32>
    %86 = arith.mulf %85, %19 : vector<24x16xf32>
    %c10 = arith.constant 10 : index
    %87 = memref.load %arg3[%c10] : memref<12xf32, #tpu.memory_space<smem>>
    %88 = vector.broadcast %87 : f32 to vector<24x16xf32>
    %89 = arith.mulf %88, %15 : vector<24x16xf32>
    %90 = arith.addf %86, %89 : vector<24x16xf32>
    %c11 = arith.constant 11 : index
    %91 = memref.load %arg3[%c11] : memref<12xf32, #tpu.memory_space<smem>>
    %92 = vector.broadcast %91 : f32 to vector<24x16xf32>
    %93 = arith.mulf %92, %20 : vector<24x16xf32>
    %94 = arith.addf %90, %93 : vector<24x16xf32>
    %c3_25 = arith.constant 3 : index
    %95 = memref.load %arg4[%c3_25] : memref<4xf32, #tpu.memory_space<smem>>
    %96 = vector.broadcast %95 : f32 to vector<24x16xf32>
    %97 = arith.addf %94, %96 : vector<24x16xf32>
    %cst_26 = arith.constant 0.000000e+00 : f32
    %98 = vector.broadcast %cst_26 : f32 to vector<24x16xf32>
    %99 = arith.cmpf oge, %97, %98 : vector<24x16xf32>
    %100 = vector.broadcast %0 : f32 to vector<24x16xf32>
    %101 = arith.mulf %100, %97 : vector<24x16xf32>
    %102 = arith.select %99, %97, %101 : vector<24x16xi1>, vector<24x16xf32>
    %cst_27 = arith.constant 0.000000e+00 : f32
    %103 = vector.broadcast %cst_27 : f32 to vector<24x16xf32>
    %104 = arith.select %18, %102, %103 : vector<24x16xi1>, vector<24x16xf32>
    %c4_i32 = arith.constant 4 : i32
    %105 = tpu.dynamic_rotate %41 by %c4_i32 dim 0 : vector<24x16xf32>, i32 -> vector<24x16xf32>
    %c0_28 = arith.constant 0 : index
    %106 = memref.load %arg6[%c0_28] : memref<80xf32, #tpu.memory_space<smem>>
    %107 = vector.broadcast %106 : f32 to vector<24x16xf32>
    %108 = arith.mulf %107, %105 : vector<24x16xf32>
    %c20 = arith.constant 20 : index
    %109 = memref.load %arg6[%c20] : memref<80xf32, #tpu.memory_space<smem>>
    %110 = vector.broadcast %109 : f32 to vector<24x16xf32>
    %111 = arith.mulf %110, %105 : vector<24x16xf32>
    %c40 = arith.constant 40 : index
    %112 = memref.load %arg6[%c40] : memref<80xf32, #tpu.memory_space<smem>>
    %113 = vector.broadcast %112 : f32 to vector<24x16xf32>
    %114 = arith.mulf %113, %105 : vector<24x16xf32>
    %c60 = arith.constant 60 : index
    %115 = memref.load %arg6[%c60] : memref<80xf32, #tpu.memory_space<smem>>
    %116 = vector.broadcast %115 : f32 to vector<24x16xf32>
    %117 = arith.mulf %116, %105 : vector<24x16xf32>
    %c4_i32_29 = arith.constant 4 : i32
    %118 = tpu.dynamic_rotate %62 by %c4_i32_29 dim 0 : vector<24x16xf32>, i32 -> vector<24x16xf32>
    %c5_30 = arith.constant 5 : index
    %119 = memref.load %arg6[%c5_30] : memref<80xf32, #tpu.memory_space<smem>>
    %120 = vector.broadcast %119 : f32 to vector<24x16xf32>
    %121 = arith.mulf %120, %118 : vector<24x16xf32>
    %122 = arith.addf %108, %121 : vector<24x16xf32>
    %c25 = arith.constant 25 : index
    %123 = memref.load %arg6[%c25] : memref<80xf32, #tpu.memory_space<smem>>
    %124 = vector.broadcast %123 : f32 to vector<24x16xf32>
    %125 = arith.mulf %124, %118 : vector<24x16xf32>
    %126 = arith.addf %111, %125 : vector<24x16xf32>
    %c45 = arith.constant 45 : index
    %127 = memref.load %arg6[%c45] : memref<80xf32, #tpu.memory_space<smem>>
    %128 = vector.broadcast %127 : f32 to vector<24x16xf32>
    %129 = arith.mulf %128, %118 : vector<24x16xf32>
    %130 = arith.addf %114, %129 : vector<24x16xf32>
    %c65 = arith.constant 65 : index
    %131 = memref.load %arg6[%c65] : memref<80xf32, #tpu.memory_space<smem>>
    %132 = vector.broadcast %131 : f32 to vector<24x16xf32>
    %133 = arith.mulf %132, %118 : vector<24x16xf32>
    %134 = arith.addf %117, %133 : vector<24x16xf32>
    %c4_i32_31 = arith.constant 4 : i32
    %135 = tpu.dynamic_rotate %83 by %c4_i32_31 dim 0 : vector<24x16xf32>, i32 -> vector<24x16xf32>
    %c10_32 = arith.constant 10 : index
    %136 = memref.load %arg6[%c10_32] : memref<80xf32, #tpu.memory_space<smem>>
    %137 = vector.broadcast %136 : f32 to vector<24x16xf32>
    %138 = arith.mulf %137, %135 : vector<24x16xf32>
    %139 = arith.addf %122, %138 : vector<24x16xf32>
    %c30 = arith.constant 30 : index
    %140 = memref.load %arg6[%c30] : memref<80xf32, #tpu.memory_space<smem>>
    %141 = vector.broadcast %140 : f32 to vector<24x16xf32>
    %142 = arith.mulf %141, %135 : vector<24x16xf32>
    %143 = arith.addf %126, %142 : vector<24x16xf32>
    %c50 = arith.constant 50 : index
    %144 = memref.load %arg6[%c50] : memref<80xf32, #tpu.memory_space<smem>>
    %145 = vector.broadcast %144 : f32 to vector<24x16xf32>
    %146 = arith.mulf %145, %135 : vector<24x16xf32>
    %147 = arith.addf %130, %146 : vector<24x16xf32>
    %c70 = arith.constant 70 : index
    %148 = memref.load %arg6[%c70] : memref<80xf32, #tpu.memory_space<smem>>
    %149 = vector.broadcast %148 : f32 to vector<24x16xf32>
    %150 = arith.mulf %149, %135 : vector<24x16xf32>
    %151 = arith.addf %134, %150 : vector<24x16xf32>
    %c4_i32_33 = arith.constant 4 : i32
    %152 = tpu.dynamic_rotate %104 by %c4_i32_33 dim 0 : vector<24x16xf32>, i32 -> vector<24x16xf32>
    %c15 = arith.constant 15 : index
    %153 = memref.load %arg6[%c15] : memref<80xf32, #tpu.memory_space<smem>>
    %154 = vector.broadcast %153 : f32 to vector<24x16xf32>
    %155 = arith.mulf %154, %152 : vector<24x16xf32>
    %156 = arith.addf %139, %155 : vector<24x16xf32>
    %c35 = arith.constant 35 : index
    %157 = memref.load %arg6[%c35] : memref<80xf32, #tpu.memory_space<smem>>
    %158 = vector.broadcast %157 : f32 to vector<24x16xf32>
    %159 = arith.mulf %158, %152 : vector<24x16xf32>
    %160 = arith.addf %143, %159 : vector<24x16xf32>
    %c55 = arith.constant 55 : index
    %161 = memref.load %arg6[%c55] : memref<80xf32, #tpu.memory_space<smem>>
    %162 = vector.broadcast %161 : f32 to vector<24x16xf32>
    %163 = arith.mulf %162, %152 : vector<24x16xf32>
    %164 = arith.addf %147, %163 : vector<24x16xf32>
    %c75 = arith.constant 75 : index
    %165 = memref.load %arg6[%c75] : memref<80xf32, #tpu.memory_space<smem>>
    %166 = vector.broadcast %165 : f32 to vector<24x16xf32>
    %167 = arith.mulf %166, %152 : vector<24x16xf32>
    %168 = arith.addf %151, %167 : vector<24x16xf32>
    %c2_i32 = arith.constant 2 : i32
    %169 = tpu.dynamic_rotate %41 by %c2_i32 dim 0 : vector<24x16xf32>, i32 -> vector<24x16xf32>
    %c1_34 = arith.constant 1 : index
    %170 = memref.load %arg6[%c1_34] : memref<80xf32, #tpu.memory_space<smem>>
    %171 = vector.broadcast %170 : f32 to vector<24x16xf32>
    %172 = arith.mulf %171, %169 : vector<24x16xf32>
    %173 = arith.addf %156, %172 : vector<24x16xf32>
    %c21 = arith.constant 21 : index
    %174 = memref.load %arg6[%c21] : memref<80xf32, #tpu.memory_space<smem>>
    %175 = vector.broadcast %174 : f32 to vector<24x16xf32>
    %176 = arith.mulf %175, %169 : vector<24x16xf32>
    %177 = arith.addf %160, %176 : vector<24x16xf32>
    %c41 = arith.constant 41 : index
    %178 = memref.load %arg6[%c41] : memref<80xf32, #tpu.memory_space<smem>>
    %179 = vector.broadcast %178 : f32 to vector<24x16xf32>
    %180 = arith.mulf %179, %169 : vector<24x16xf32>
    %181 = arith.addf %164, %180 : vector<24x16xf32>
    %c61 = arith.constant 61 : index
    %182 = memref.load %arg6[%c61] : memref<80xf32, #tpu.memory_space<smem>>
    %183 = vector.broadcast %182 : f32 to vector<24x16xf32>
    %184 = arith.mulf %183, %169 : vector<24x16xf32>
    %185 = arith.addf %168, %184 : vector<24x16xf32>
    %c2_i32_35 = arith.constant 2 : i32
    %186 = tpu.dynamic_rotate %62 by %c2_i32_35 dim 0 : vector<24x16xf32>, i32 -> vector<24x16xf32>
    %c6_36 = arith.constant 6 : index
    %187 = memref.load %arg6[%c6_36] : memref<80xf32, #tpu.memory_space<smem>>
    %188 = vector.broadcast %187 : f32 to vector<24x16xf32>
    %189 = arith.mulf %188, %186 : vector<24x16xf32>
    %190 = arith.addf %173, %189 : vector<24x16xf32>
    %c26 = arith.constant 26 : index
    %191 = memref.load %arg6[%c26] : memref<80xf32, #tpu.memory_space<smem>>
    %192 = vector.broadcast %191 : f32 to vector<24x16xf32>
    %193 = arith.mulf %192, %186 : vector<24x16xf32>
    %194 = arith.addf %177, %193 : vector<24x16xf32>
    %c46 = arith.constant 46 : index
    %195 = memref.load %arg6[%c46] : memref<80xf32, #tpu.memory_space<smem>>
    %196 = vector.broadcast %195 : f32 to vector<24x16xf32>
    %197 = arith.mulf %196, %186 : vector<24x16xf32>
    %198 = arith.addf %181, %197 : vector<24x16xf32>
    %c66 = arith.constant 66 : index
    %199 = memref.load %arg6[%c66] : memref<80xf32, #tpu.memory_space<smem>>
    %200 = vector.broadcast %199 : f32 to vector<24x16xf32>
    %201 = arith.mulf %200, %186 : vector<24x16xf32>
    %202 = arith.addf %185, %201 : vector<24x16xf32>
    %c2_i32_37 = arith.constant 2 : i32
    %203 = tpu.dynamic_rotate %83 by %c2_i32_37 dim 0 : vector<24x16xf32>, i32 -> vector<24x16xf32>
    %c11_38 = arith.constant 11 : index
    %204 = memref.load %arg6[%c11_38] : memref<80xf32, #tpu.memory_space<smem>>
    %205 = vector.broadcast %204 : f32 to vector<24x16xf32>
    %206 = arith.mulf %205, %203 : vector<24x16xf32>
    %207 = arith.addf %190, %206 : vector<24x16xf32>
    %c31 = arith.constant 31 : index
    %208 = memref.load %arg6[%c31] : memref<80xf32, #tpu.memory_space<smem>>
    %209 = vector.broadcast %208 : f32 to vector<24x16xf32>
    %210 = arith.mulf %209, %203 : vector<24x16xf32>
    %211 = arith.addf %194, %210 : vector<24x16xf32>
    %c51 = arith.constant 51 : index
    %212 = memref.load %arg6[%c51] : memref<80xf32, #tpu.memory_space<smem>>
    %213 = vector.broadcast %212 : f32 to vector<24x16xf32>
    %214 = arith.mulf %213, %203 : vector<24x16xf32>
    %215 = arith.addf %198, %214 : vector<24x16xf32>
    %c71 = arith.constant 71 : index
    %216 = memref.load %arg6[%c71] : memref<80xf32, #tpu.memory_space<smem>>
    %217 = vector.broadcast %216 : f32 to vector<24x16xf32>
    %218 = arith.mulf %217, %203 : vector<24x16xf32>
    %219 = arith.addf %202, %218 : vector<24x16xf32>
    %c2_i32_39 = arith.constant 2 : i32
    %220 = tpu.dynamic_rotate %104 by %c2_i32_39 dim 0 : vector<24x16xf32>, i32 -> vector<24x16xf32>
    %c16 = arith.constant 16 : index
    %221 = memref.load %arg6[%c16] : memref<80xf32, #tpu.memory_space<smem>>
    %222 = vector.broadcast %221 : f32 to vector<24x16xf32>
    %223 = arith.mulf %222, %220 : vector<24x16xf32>
    %224 = arith.addf %207, %223 : vector<24x16xf32>
    %c36 = arith.constant 36 : index
    %225 = memref.load %arg6[%c36] : memref<80xf32, #tpu.memory_space<smem>>
    %226 = vector.broadcast %225 : f32 to vector<24x16xf32>
    %227 = arith.mulf %226, %220 : vector<24x16xf32>
    %228 = arith.addf %211, %227 : vector<24x16xf32>
    %c56 = arith.constant 56 : index
    %229 = memref.load %arg6[%c56] : memref<80xf32, #tpu.memory_space<smem>>
    %230 = vector.broadcast %229 : f32 to vector<24x16xf32>
    %231 = arith.mulf %230, %220 : vector<24x16xf32>
    %232 = arith.addf %215, %231 : vector<24x16xf32>
    %c76 = arith.constant 76 : index
    %233 = memref.load %arg6[%c76] : memref<80xf32, #tpu.memory_space<smem>>
    %234 = vector.broadcast %233 : f32 to vector<24x16xf32>
    %235 = arith.mulf %234, %220 : vector<24x16xf32>
    %236 = arith.addf %219, %235 : vector<24x16xf32>
    %c2_40 = arith.constant 2 : index
    %237 = memref.load %arg6[%c2_40] : memref<80xf32, #tpu.memory_space<smem>>
    %238 = vector.broadcast %237 : f32 to vector<24x16xf32>
    %239 = arith.mulf %238, %41 : vector<24x16xf32>
    %240 = arith.addf %224, %239 : vector<24x16xf32>
    %c22 = arith.constant 22 : index
    %241 = memref.load %arg6[%c22] : memref<80xf32, #tpu.memory_space<smem>>
    %242 = vector.broadcast %241 : f32 to vector<24x16xf32>
    %243 = arith.mulf %242, %41 : vector<24x16xf32>
    %244 = arith.addf %228, %243 : vector<24x16xf32>
    %c42 = arith.constant 42 : index
    %245 = memref.load %arg6[%c42] : memref<80xf32, #tpu.memory_space<smem>>
    %246 = vector.broadcast %245 : f32 to vector<24x16xf32>
    %247 = arith.mulf %246, %41 : vector<24x16xf32>
    %248 = arith.addf %232, %247 : vector<24x16xf32>
    %c62 = arith.constant 62 : index
    %249 = memref.load %arg6[%c62] : memref<80xf32, #tpu.memory_space<smem>>
    %250 = vector.broadcast %249 : f32 to vector<24x16xf32>
    %251 = arith.mulf %250, %41 : vector<24x16xf32>
    %252 = arith.addf %236, %251 : vector<24x16xf32>
    %c7_41 = arith.constant 7 : index
    %253 = memref.load %arg6[%c7_41] : memref<80xf32, #tpu.memory_space<smem>>
    %254 = vector.broadcast %253 : f32 to vector<24x16xf32>
    %255 = arith.mulf %254, %62 : vector<24x16xf32>
    %256 = arith.addf %240, %255 : vector<24x16xf32>
    %c27 = arith.constant 27 : index
    %257 = memref.load %arg6[%c27] : memref<80xf32, #tpu.memory_space<smem>>
    %258 = vector.broadcast %257 : f32 to vector<24x16xf32>
    %259 = arith.mulf %258, %62 : vector<24x16xf32>
    %260 = arith.addf %244, %259 : vector<24x16xf32>
    %c47 = arith.constant 47 : index
    %261 = memref.load %arg6[%c47] : memref<80xf32, #tpu.memory_space<smem>>
    %262 = vector.broadcast %261 : f32 to vector<24x16xf32>
    %263 = arith.mulf %262, %62 : vector<24x16xf32>
    %264 = arith.addf %248, %263 : vector<24x16xf32>
    %c67 = arith.constant 67 : index
    %265 = memref.load %arg6[%c67] : memref<80xf32, #tpu.memory_space<smem>>
    %266 = vector.broadcast %265 : f32 to vector<24x16xf32>
    %267 = arith.mulf %266, %62 : vector<24x16xf32>
    %268 = arith.addf %252, %267 : vector<24x16xf32>
    %c12 = arith.constant 12 : index
    %269 = memref.load %arg6[%c12] : memref<80xf32, #tpu.memory_space<smem>>
    %270 = vector.broadcast %269 : f32 to vector<24x16xf32>
    %271 = arith.mulf %270, %83 : vector<24x16xf32>
    %272 = arith.addf %256, %271 : vector<24x16xf32>
    %c32 = arith.constant 32 : index
    %273 = memref.load %arg6[%c32] : memref<80xf32, #tpu.memory_space<smem>>
    %274 = vector.broadcast %273 : f32 to vector<24x16xf32>
    %275 = arith.mulf %274, %83 : vector<24x16xf32>
    %276 = arith.addf %260, %275 : vector<24x16xf32>
    %c52 = arith.constant 52 : index
    %277 = memref.load %arg6[%c52] : memref<80xf32, #tpu.memory_space<smem>>
    %278 = vector.broadcast %277 : f32 to vector<24x16xf32>
    %279 = arith.mulf %278, %83 : vector<24x16xf32>
    %280 = arith.addf %264, %279 : vector<24x16xf32>
    %c72 = arith.constant 72 : index
    %281 = memref.load %arg6[%c72] : memref<80xf32, #tpu.memory_space<smem>>
    %282 = vector.broadcast %281 : f32 to vector<24x16xf32>
    %283 = arith.mulf %282, %83 : vector<24x16xf32>
    %284 = arith.addf %268, %283 : vector<24x16xf32>
    %c17 = arith.constant 17 : index
    %285 = memref.load %arg6[%c17] : memref<80xf32, #tpu.memory_space<smem>>
    %286 = vector.broadcast %285 : f32 to vector<24x16xf32>
    %287 = arith.mulf %286, %104 : vector<24x16xf32>
    %288 = arith.addf %272, %287 : vector<24x16xf32>
    %c37 = arith.constant 37 : index
    %289 = memref.load %arg6[%c37] : memref<80xf32, #tpu.memory_space<smem>>
    %290 = vector.broadcast %289 : f32 to vector<24x16xf32>
    %291 = arith.mulf %290, %104 : vector<24x16xf32>
    %292 = arith.addf %276, %291 : vector<24x16xf32>
    %c57 = arith.constant 57 : index
    %293 = memref.load %arg6[%c57] : memref<80xf32, #tpu.memory_space<smem>>
    %294 = vector.broadcast %293 : f32 to vector<24x16xf32>
    %295 = arith.mulf %294, %104 : vector<24x16xf32>
    %296 = arith.addf %280, %295 : vector<24x16xf32>
    %c77 = arith.constant 77 : index
    %297 = memref.load %arg6[%c77] : memref<80xf32, #tpu.memory_space<smem>>
    %298 = vector.broadcast %297 : f32 to vector<24x16xf32>
    %299 = arith.mulf %298, %104 : vector<24x16xf32>
    %300 = arith.addf %284, %299 : vector<24x16xf32>
    %c22_i32 = arith.constant 22 : i32
    %301 = tpu.dynamic_rotate %41 by %c22_i32 dim 0 : vector<24x16xf32>, i32 -> vector<24x16xf32>
    %c3_42 = arith.constant 3 : index
    %302 = memref.load %arg6[%c3_42] : memref<80xf32, #tpu.memory_space<smem>>
    %303 = vector.broadcast %302 : f32 to vector<24x16xf32>
    %304 = arith.mulf %303, %301 : vector<24x16xf32>
    %305 = arith.addf %288, %304 : vector<24x16xf32>
    %c23 = arith.constant 23 : index
    %306 = memref.load %arg6[%c23] : memref<80xf32, #tpu.memory_space<smem>>
    %307 = vector.broadcast %306 : f32 to vector<24x16xf32>
    %308 = arith.mulf %307, %301 : vector<24x16xf32>
    %309 = arith.addf %292, %308 : vector<24x16xf32>
    %c43 = arith.constant 43 : index
    %310 = memref.load %arg6[%c43] : memref<80xf32, #tpu.memory_space<smem>>
    %311 = vector.broadcast %310 : f32 to vector<24x16xf32>
    %312 = arith.mulf %311, %301 : vector<24x16xf32>
    %313 = arith.addf %296, %312 : vector<24x16xf32>
    %c63 = arith.constant 63 : index
    %314 = memref.load %arg6[%c63] : memref<80xf32, #tpu.memory_space<smem>>
    %315 = vector.broadcast %314 : f32 to vector<24x16xf32>
    %316 = arith.mulf %315, %301 : vector<24x16xf32>
    %317 = arith.addf %300, %316 : vector<24x16xf32>
    %c22_i32_43 = arith.constant 22 : i32
    %318 = tpu.dynamic_rotate %62 by %c22_i32_43 dim 0 : vector<24x16xf32>, i32 -> vector<24x16xf32>
    %c8_44 = arith.constant 8 : index
    %319 = memref.load %arg6[%c8_44] : memref<80xf32, #tpu.memory_space<smem>>
    %320 = vector.broadcast %319 : f32 to vector<24x16xf32>
    %321 = arith.mulf %320, %318 : vector<24x16xf32>
    %322 = arith.addf %305, %321 : vector<24x16xf32>
    %c28 = arith.constant 28 : index
    %323 = memref.load %arg6[%c28] : memref<80xf32, #tpu.memory_space<smem>>
    %324 = vector.broadcast %323 : f32 to vector<24x16xf32>
    %325 = arith.mulf %324, %318 : vector<24x16xf32>
    %326 = arith.addf %309, %325 : vector<24x16xf32>
    %c48 = arith.constant 48 : index
    %327 = memref.load %arg6[%c48] : memref<80xf32, #tpu.memory_space<smem>>
    %328 = vector.broadcast %327 : f32 to vector<24x16xf32>
    %329 = arith.mulf %328, %318 : vector<24x16xf32>
    %330 = arith.addf %313, %329 : vector<24x16xf32>
    %c68 = arith.constant 68 : index
    %331 = memref.load %arg6[%c68] : memref<80xf32, #tpu.memory_space<smem>>
    %332 = vector.broadcast %331 : f32 to vector<24x16xf32>
    %333 = arith.mulf %332, %318 : vector<24x16xf32>
    %334 = arith.addf %317, %333 : vector<24x16xf32>
    %c22_i32_45 = arith.constant 22 : i32
    %335 = tpu.dynamic_rotate %83 by %c22_i32_45 dim 0 : vector<24x16xf32>, i32 -> vector<24x16xf32>
    %c13 = arith.constant 13 : index
    %336 = memref.load %arg6[%c13] : memref<80xf32, #tpu.memory_space<smem>>
    %337 = vector.broadcast %336 : f32 to vector<24x16xf32>
    %338 = arith.mulf %337, %335 : vector<24x16xf32>
    %339 = arith.addf %322, %338 : vector<24x16xf32>
    %c33 = arith.constant 33 : index
    %340 = memref.load %arg6[%c33] : memref<80xf32, #tpu.memory_space<smem>>
    %341 = vector.broadcast %340 : f32 to vector<24x16xf32>
    %342 = arith.mulf %341, %335 : vector<24x16xf32>
    %343 = arith.addf %326, %342 : vector<24x16xf32>
    %c53 = arith.constant 53 : index
    %344 = memref.load %arg6[%c53] : memref<80xf32, #tpu.memory_space<smem>>
    %345 = vector.broadcast %344 : f32 to vector<24x16xf32>
    %346 = arith.mulf %345, %335 : vector<24x16xf32>
    %347 = arith.addf %330, %346 : vector<24x16xf32>
    %c73 = arith.constant 73 : index
    %348 = memref.load %arg6[%c73] : memref<80xf32, #tpu.memory_space<smem>>
    %349 = vector.broadcast %348 : f32 to vector<24x16xf32>
    %350 = arith.mulf %349, %335 : vector<24x16xf32>
    %351 = arith.addf %334, %350 : vector<24x16xf32>
    %c22_i32_46 = arith.constant 22 : i32
    %352 = tpu.dynamic_rotate %104 by %c22_i32_46 dim 0 : vector<24x16xf32>, i32 -> vector<24x16xf32>
    %c18 = arith.constant 18 : index
    %353 = memref.load %arg6[%c18] : memref<80xf32, #tpu.memory_space<smem>>
    %354 = vector.broadcast %353 : f32 to vector<24x16xf32>
    %355 = arith.mulf %354, %352 : vector<24x16xf32>
    %356 = arith.addf %339, %355 : vector<24x16xf32>
    %c38 = arith.constant 38 : index
    %357 = memref.load %arg6[%c38] : memref<80xf32, #tpu.memory_space<smem>>
    %358 = vector.broadcast %357 : f32 to vector<24x16xf32>
    %359 = arith.mulf %358, %352 : vector<24x16xf32>
    %360 = arith.addf %343, %359 : vector<24x16xf32>
    %c58 = arith.constant 58 : index
    %361 = memref.load %arg6[%c58] : memref<80xf32, #tpu.memory_space<smem>>
    %362 = vector.broadcast %361 : f32 to vector<24x16xf32>
    %363 = arith.mulf %362, %352 : vector<24x16xf32>
    %364 = arith.addf %347, %363 : vector<24x16xf32>
    %c78 = arith.constant 78 : index
    %365 = memref.load %arg6[%c78] : memref<80xf32, #tpu.memory_space<smem>>
    %366 = vector.broadcast %365 : f32 to vector<24x16xf32>
    %367 = arith.mulf %366, %352 : vector<24x16xf32>
    %368 = arith.addf %351, %367 : vector<24x16xf32>
    %c20_i32 = arith.constant 20 : i32
    %369 = tpu.dynamic_rotate %41 by %c20_i32 dim 0 : vector<24x16xf32>, i32 -> vector<24x16xf32>
    %c4_47 = arith.constant 4 : index
    %370 = memref.load %arg6[%c4_47] : memref<80xf32, #tpu.memory_space<smem>>
    %371 = vector.broadcast %370 : f32 to vector<24x16xf32>
    %372 = arith.mulf %371, %369 : vector<24x16xf32>
    %373 = arith.addf %356, %372 : vector<24x16xf32>
    %c24 = arith.constant 24 : index
    %374 = memref.load %arg6[%c24] : memref<80xf32, #tpu.memory_space<smem>>
    %375 = vector.broadcast %374 : f32 to vector<24x16xf32>
    %376 = arith.mulf %375, %369 : vector<24x16xf32>
    %377 = arith.addf %360, %376 : vector<24x16xf32>
    %c44 = arith.constant 44 : index
    %378 = memref.load %arg6[%c44] : memref<80xf32, #tpu.memory_space<smem>>
    %379 = vector.broadcast %378 : f32 to vector<24x16xf32>
    %380 = arith.mulf %379, %369 : vector<24x16xf32>
    %381 = arith.addf %364, %380 : vector<24x16xf32>
    %c64 = arith.constant 64 : index
    %382 = memref.load %arg6[%c64] : memref<80xf32, #tpu.memory_space<smem>>
    %383 = vector.broadcast %382 : f32 to vector<24x16xf32>
    %384 = arith.mulf %383, %369 : vector<24x16xf32>
    %385 = arith.addf %368, %384 : vector<24x16xf32>
    %c20_i32_48 = arith.constant 20 : i32
    %386 = tpu.dynamic_rotate %62 by %c20_i32_48 dim 0 : vector<24x16xf32>, i32 -> vector<24x16xf32>
    %c9_49 = arith.constant 9 : index
    %387 = memref.load %arg6[%c9_49] : memref<80xf32, #tpu.memory_space<smem>>
    %388 = vector.broadcast %387 : f32 to vector<24x16xf32>
    %389 = arith.mulf %388, %386 : vector<24x16xf32>
    %390 = arith.addf %373, %389 : vector<24x16xf32>
    %c29 = arith.constant 29 : index
    %391 = memref.load %arg6[%c29] : memref<80xf32, #tpu.memory_space<smem>>
    %392 = vector.broadcast %391 : f32 to vector<24x16xf32>
    %393 = arith.mulf %392, %386 : vector<24x16xf32>
    %394 = arith.addf %377, %393 : vector<24x16xf32>
    %c49 = arith.constant 49 : index
    %395 = memref.load %arg6[%c49] : memref<80xf32, #tpu.memory_space<smem>>
    %396 = vector.broadcast %395 : f32 to vector<24x16xf32>
    %397 = arith.mulf %396, %386 : vector<24x16xf32>
    %398 = arith.addf %381, %397 : vector<24x16xf32>
    %c69 = arith.constant 69 : index
    %399 = memref.load %arg6[%c69] : memref<80xf32, #tpu.memory_space<smem>>
    %400 = vector.broadcast %399 : f32 to vector<24x16xf32>
    %401 = arith.mulf %400, %386 : vector<24x16xf32>
    %402 = arith.addf %385, %401 : vector<24x16xf32>
    %c20_i32_50 = arith.constant 20 : i32
    %403 = tpu.dynamic_rotate %83 by %c20_i32_50 dim 0 : vector<24x16xf32>, i32 -> vector<24x16xf32>
    %c14 = arith.constant 14 : index
    %404 = memref.load %arg6[%c14] : memref<80xf32, #tpu.memory_space<smem>>
    %405 = vector.broadcast %404 : f32 to vector<24x16xf32>
    %406 = arith.mulf %405, %403 : vector<24x16xf32>
    %407 = arith.addf %390, %406 : vector<24x16xf32>
    %c34 = arith.constant 34 : index
    %408 = memref.load %arg6[%c34] : memref<80xf32, #tpu.memory_space<smem>>
    %409 = vector.broadcast %408 : f32 to vector<24x16xf32>
    %410 = arith.mulf %409, %403 : vector<24x16xf32>
    %411 = arith.addf %394, %410 : vector<24x16xf32>
    %c54 = arith.constant 54 : index
    %412 = memref.load %arg6[%c54] : memref<80xf32, #tpu.memory_space<smem>>
    %413 = vector.broadcast %412 : f32 to vector<24x16xf32>
    %414 = arith.mulf %413, %403 : vector<24x16xf32>
    %415 = arith.addf %398, %414 : vector<24x16xf32>
    %c74 = arith.constant 74 : index
    %416 = memref.load %arg6[%c74] : memref<80xf32, #tpu.memory_space<smem>>
    %417 = vector.broadcast %416 : f32 to vector<24x16xf32>
    %418 = arith.mulf %417, %403 : vector<24x16xf32>
    %419 = arith.addf %402, %418 : vector<24x16xf32>
    %c20_i32_51 = arith.constant 20 : i32
    %420 = tpu.dynamic_rotate %104 by %c20_i32_51 dim 0 : vector<24x16xf32>, i32 -> vector<24x16xf32>
    %c19 = arith.constant 19 : index
    %421 = memref.load %arg6[%c19] : memref<80xf32, #tpu.memory_space<smem>>
    %422 = vector.broadcast %421 : f32 to vector<24x16xf32>
    %423 = arith.mulf %422, %420 : vector<24x16xf32>
    %424 = arith.addf %407, %423 : vector<24x16xf32>
    %c39 = arith.constant 39 : index
    %425 = memref.load %arg6[%c39] : memref<80xf32, #tpu.memory_space<smem>>
    %426 = vector.broadcast %425 : f32 to vector<24x16xf32>
    %427 = arith.mulf %426, %420 : vector<24x16xf32>
    %428 = arith.addf %411, %427 : vector<24x16xf32>
    %c59 = arith.constant 59 : index
    %429 = memref.load %arg6[%c59] : memref<80xf32, #tpu.memory_space<smem>>
    %430 = vector.broadcast %429 : f32 to vector<24x16xf32>
    %431 = arith.mulf %430, %420 : vector<24x16xf32>
    %432 = arith.addf %415, %431 : vector<24x16xf32>
    %c79 = arith.constant 79 : index
    %433 = memref.load %arg6[%c79] : memref<80xf32, #tpu.memory_space<smem>>
    %434 = vector.broadcast %433 : f32 to vector<24x16xf32>
    %435 = arith.mulf %434, %420 : vector<24x16xf32>
    %436 = arith.addf %419, %435 : vector<24x16xf32>
    %437 = vector.extract_strided_slice %424 {offsets = [0, 0], sizes = [16, 16], strides = [1, 1]} : vector<24x16xf32> to vector<16x16xf32>
    %c0_52 = arith.constant 0 : index
    %438 = memref.load %arg7[%c0_52] : memref<4xf32, #tpu.memory_space<smem>>
    %439 = vector.broadcast %438 : f32 to vector<16x16xf32>
    %440 = arith.addf %437, %439 : vector<16x16xf32>
    %441 = arith.negf %440 : vector<16x16xf32>
    %442 = math.exp %441 : vector<16x16xf32>
    %cst_53 = arith.constant 1.000000e+00 : f32
    %443 = vector.broadcast %cst_53 : f32 to vector<16x16xf32>
    %444 = arith.addf %443, %442 : vector<16x16xf32>
    %445 = arith.divf %443, %444 : vector<16x16xf32>
    %c0_54 = arith.constant 0 : index
    %c0_55 = arith.constant 0 : index
    %c0_56 = arith.constant 0 : index
    %c0_57 = arith.constant 0 : index
    %446 = vector.load %arg8[%c0_54, %c0_55, %c0_56, %c0_57] : memref<1x4x16x16xf32, #tpu.memory_space<vmem>>, vector<1x1x16x16xf32>
    %447 = vector.shape_cast %446 : vector<1x1x16x16xf32> to vector<16x16xf32>
    %448 = vector.shape_cast %445 : vector<16x16xf32> to vector<1x1x16x16xf32>
    tpu.vector_store %arg8[%c0_54, %c0_55, %c0_56, %c0_57], %448 {strides = array<i32>} : memref<1x4x16x16xf32, #tpu.memory_space<vmem>>, vector<1x1x16x16xf32>,
    %449 = vector.extract_strided_slice %428 {offsets = [0, 0], sizes = [16, 16], strides = [1, 1]} : vector<24x16xf32> to vector<16x16xf32>
    %c1_58 = arith.constant 1 : index
    %450 = memref.load %arg7[%c1_58] : memref<4xf32, #tpu.memory_space<smem>>
    %451 = vector.broadcast %450 : f32 to vector<16x16xf32>
    %452 = arith.addf %449, %451 : vector<16x16xf32>
    %453 = arith.negf %452 : vector<16x16xf32>
    %454 = math.exp %453 : vector<16x16xf32>
    %cst_59 = arith.constant 1.000000e+00 : f32
    %455 = vector.broadcast %cst_59 : f32 to vector<16x16xf32>
    %456 = arith.addf %455, %454 : vector<16x16xf32>
    %457 = arith.divf %455, %456 : vector<16x16xf32>
    %c0_60 = arith.constant 0 : index
    %c1_61 = arith.constant 1 : index
    %c0_62 = arith.constant 0 : index
    %c0_63 = arith.constant 0 : index
    %458 = vector.load %arg8[%c0_60, %c1_61, %c0_62, %c0_63] : memref<1x4x16x16xf32, #tpu.memory_space<vmem>>, vector<1x1x16x16xf32>
    %459 = vector.shape_cast %458 : vector<1x1x16x16xf32> to vector<16x16xf32>
    %460 = vector.shape_cast %457 : vector<16x16xf32> to vector<1x1x16x16xf32>
    tpu.vector_store %arg8[%c0_60, %c1_61, %c0_62, %c0_63], %460 {strides = array<i32>} : memref<1x4x16x16xf32, #tpu.memory_space<vmem>>, vector<1x1x16x16xf32>,
    %461 = vector.extract_strided_slice %432 {offsets = [0, 0], sizes = [16, 16], strides = [1, 1]} : vector<24x16xf32> to vector<16x16xf32>
    %c2_64 = arith.constant 2 : index
    %462 = memref.load %arg7[%c2_64] : memref<4xf32, #tpu.memory_space<smem>>
    %463 = vector.broadcast %462 : f32 to vector<16x16xf32>
    %464 = arith.addf %461, %463 : vector<16x16xf32>
    %465 = arith.negf %464 : vector<16x16xf32>
    %466 = math.exp %465 : vector<16x16xf32>
    %cst_65 = arith.constant 1.000000e+00 : f32
    %467 = vector.broadcast %cst_65 : f32 to vector<16x16xf32>
    %468 = arith.addf %467, %466 : vector<16x16xf32>
    %469 = arith.divf %467, %468 : vector<16x16xf32>
    %c0_66 = arith.constant 0 : index
    %c2_67 = arith.constant 2 : index
    %c0_68 = arith.constant 0 : index
    %c0_69 = arith.constant 0 : index
    %470 = vector.load %arg8[%c0_66, %c2_67, %c0_68, %c0_69] : memref<1x4x16x16xf32, #tpu.memory_space<vmem>>, vector<1x1x16x16xf32>
    %471 = vector.shape_cast %470 : vector<1x1x16x16xf32> to vector<16x16xf32>
    %472 = vector.shape_cast %469 : vector<16x16xf32> to vector<1x1x16x16xf32>
    tpu.vector_store %arg8[%c0_66, %c2_67, %c0_68, %c0_69], %472 {strides = array<i32>} : memref<1x4x16x16xf32, #tpu.memory_space<vmem>>, vector<1x1x16x16xf32>,
    %473 = vector.extract_strided_slice %436 {offsets = [0, 0], sizes = [16, 16], strides = [1, 1]} : vector<24x16xf32> to vector<16x16xf32>
    %c3_70 = arith.constant 3 : index
    %474 = memref.load %arg7[%c3_70] : memref<4xf32, #tpu.memory_space<smem>>
    %475 = vector.broadcast %474 : f32 to vector<16x16xf32>
    %476 = arith.addf %473, %475 : vector<16x16xf32>
    %477 = arith.negf %476 : vector<16x16xf32>
    %478 = math.exp %477 : vector<16x16xf32>
    %cst_71 = arith.constant 1.000000e+00 : f32
    %479 = vector.broadcast %cst_71 : f32 to vector<16x16xf32>
    %480 = arith.addf %479, %478 : vector<16x16xf32>
    %481 = arith.divf %479, %480 : vector<16x16xf32>
    %c0_72 = arith.constant 0 : index
    %c3_73 = arith.constant 3 : index
    %c0_74 = arith.constant 0 : index
    %c0_75 = arith.constant 0 : index
    %482 = vector.load %arg8[%c0_72, %c3_73, %c0_74, %c0_75] : memref<1x4x16x16xf32, #tpu.memory_space<vmem>>, vector<1x1x16x16xf32>
    %483 = vector.shape_cast %482 : vector<1x1x16x16xf32> to vector<16x16xf32>
    %484 = vector.shape_cast %481 : vector<16x16xf32> to vector<1x1x16x16xf32>
    tpu.vector_store %arg8[%c0_72, %c3_73, %c0_74, %c0_75], %484 {strides = array<i32>} : memref<1x4x16x16xf32, #tpu.memory_space<vmem>>, vector<1x1x16x16xf32>,
    return
  }
  func.func @transform_0(%arg0: i32, %arg1: i32) -> (i32, i32, i32, i32) {
    %c0_i32 = arith.constant 0 : i32
    %c0_i32_0 = arith.constant 0 : i32
    %c0_i32_1 = arith.constant 0 : i32
    return %arg0, %c0_i32, %c0_i32_0, %arg1 : i32, i32, i32, i32
  }
  func.func @transform_1(%arg0: i32, %arg1: i32) -> i32 {
    %c0_i32 = arith.constant 0 : i32
    %c0_i32_0 = arith.constant 0 : i32
    return %c0_i32 : i32
  }
  func.func @transform_2(%arg0: i32, %arg1: i32) -> i32 {
    %c0_i32 = arith.constant 0 : i32
    %c0_i32_0 = arith.constant 0 : i32
    return %c0_i32 : i32
  }
  func.func @transform_3(%arg0: i32, %arg1: i32) -> i32 {
    %c0_i32 = arith.constant 0 : i32
    %c0_i32_0 = arith.constant 0 : i32
    return %c0_i32 : i32
  }
  func.func @transform_4(%arg0: i32, %arg1: i32) -> i32 {
    %c0_i32 = arith.constant 0 : i32
    %c0_i32_0 = arith.constant 0 : i32
    return %c0_i32 : i32
  }
  func.func @transform_5(%arg0: i32, %arg1: i32) -> i32 {
    %c0_i32 = arith.constant 0 : i32
    %c0_i32_0 = arith.constant 0 : i32
    return %c0_i32 : i32
  }
  func.func @transform_6(%arg0: i32, %arg1: i32) -> (i32, i32, i32, i32) {
    %c0_i32 = arith.constant 0 : i32
    %c0_i32_0 = arith.constant 0 : i32
    %c0_i32_1 = arith.constant 0 : i32
    return %arg0, %c0_i32, %c0_i32_0, %arg1 : i32, i32, i32, i32
  }
}

</mosaic_0001>

<llo_original>
// kernel: tpu_custom_call.1
$region0: #{tpu_custom_call.1}
  #allocation0 [shape = 'u32[]', space=smem, size = 0x4, offset = 0x4, fixed_abs, tag = 'smem constant byte address 0x4 - core index']
  #allocation1 [shape = 'u32[144,128]{1,0:T(1,128)}', space=vmem, size = 0x12000, scoped, tag = 'internal scratch']
  #allocation2 [shape = 'f32[1]{0:T(128)S(6)}', space=smem, size = 0x200, scoped, tag = 'scoped memory for tpu_custom_call.1']
  %s0 = inlined_call_operand.vmem [shape: f32[2,4,24,16], index: 0, kind: input, shape index: {}]
  %s1 = inlined_call_operand.vmem [shape: f32[12], index: 1, kind: input, shape index: {}]
  %s2 = inlined_call_operand.vmem [shape: f32[4], index: 2, kind: input, shape index: {}]
  %s3 = inlined_call_operand.<no memory space> [shape: f32[1], index: 3, kind: input, shape index: {}]
  %s4 = inlined_call_operand.vmem [shape: f32[80], index: 4, kind: input, shape index: {}]
  %s5 = inlined_call_operand.vmem [shape: f32[4], index: 5, kind: input, shape index: {}]
  %s6 = inlined_call_operand.hbm [shape: f32[2,4,16,16], index: 6, kind: output, shape index: {}]
  %s7 = sld [smem:[#allocation0]]
  $region73: #{tpu_custom_call.1} parent=0
    _
  %s9 = ssub.s32 1, %s7
  %s10 = scalar_select 0, %s9, %s7
  %11 = sst [smem:[#allocation2]] %s3
  $region1: #{tpu_custom_call.1} parent=0
    #allocation3 [shape = 'u8[512]{0}', space=smem, size = 0x200, scoped, tag = 'input window, operand 1, single buffered']
    #allocation4 [shape = 's32[2]{0}', space=sflag, size = 0x8, scoped, tag = 'scoped memory for tpu_custom_call.1']
    #allocation5 [shape = 's32[2]{0}', space=sflag, size = 0x8, scoped, tag = 'scoped memory for tpu_custom_call.1']
    #allocation6 [shape = 'u8[512]{0}', space=smem, size = 0x200, scoped, tag = 'input window, operand 2, single buffered']
    #allocation7 [shape = 's32[1]{0}', space=sflag, size = 0x4, scoped, tag = 'scoped memory for tpu_custom_call.1']
    #allocation8 [shape = 'u8[512]{0}', space=smem, size = 0x200, scoped, tag = 'input window, operand 4, single buffered']
    #allocation9 [shape = 'u8[512]{0}', space=smem, size = 0x200, scoped, tag = 'input window, operand 5, single buffered']
    #allocation10 [shape = 's32[1]{0}', space=sflag, size = 0x4, scoped, tag = 'scoped memory for tpu_custom_call.1']
    #allocation11 [shape = 'u8[65536]{0}', space=vmem, size = 0x10000, scoped, tag = 'output window, operand 0']
    %12 = vsyncpa [#allocation5], 0
    %13 = vsyncpa [#allocation7], 0
    %14 = vsyncpa [#allocation10], 0
    %15 = vsyncpa [#allocation4], 0
    %s16 = scalar_lea.sflag [#allocation4], 1
    %17 = vsyncpa %s16, 0
    loop: start=0, step=1, limit=4
    $region2: #{tpu_custom_call.1} parent=1 // loop_pre_header
      _
    $region3: #{tpu_custom_call.1} parent=1 // loop_header
      %s19 = sphi 0, %s23
      %p20 = scmp.ge.s32.totalorder %s19, 4
      %s26 = sphi 0, %s38
      %s27 = sphi 0, %s34
      %s28 = sphi 0, %s26
      %s29 = sphi 0, %s27
      %s30 = sphi 0, %s28
      %s31 = sphi 0, %s29
      %s43 = sphi 0, %s45
      %s46 = sphi 0, %s43
      %s47 = sphi 0, %s46
      %s63 = sphi 0, %s47
      %s67 = sphi 0, %s67
      %s69 = sphi 0, %s67
      %s70 = sphi 0, %s69
      %s84 = sphi 0, %s70
      %s88 = sphi 0, %s88
      %s90 = sphi 0, %s88
      %s91 = sphi 0, %s90
      %s105 = sphi 0, %s91
      %s109 = sphi 0, %s109
      %s111 = sphi 0, %s109
      %s112 = sphi 0, %s111
      %s126 = sphi 0, %s112
      %s130 = sphi 0, %s130
      %s132 = sphi 0, %s130
      %s133 = sphi 0, %s132
      %s147 = sphi 0, %s133
      %s151 = sphi 0, %s151
      %s153 = sphi 0, %s151
      %s154 = sphi 0, %s153
      %s168 = sphi 0, %s154
      %s176 = sphi 0, %s178
      %s179 = sphi 0, %s176
      %s180 = sphi 0, %s179
      %s196 = sphi 0, %s180
    $region4: #{tpu_custom_call.1} parent=1 // loop_header_branch
      %22 = sbr.rel (%p20) target = $region8
    $region5: #{tpu_custom_call.1} parent=1 // loop_body
      %s24 = ssub.s32 %s19, 1
      %s25 = ssub.s32 %s19, 2
      %s32 = sadd.s32 1, %s27
      %p33 = scmp.ge.s32.totalorder %s32, 1
      %s34 = scalar_select %p33, 0, %s32
      %s35 = sadd.s32 1, %s26
      %s36 = scalar_select %p33, %s35, %s26
      %p37 = scmp.ge.s32.totalorder %s36, 2
      %s38 = scalar_select %p37, 0, %s36
      %s39 = ssub.s32 %s26, %s38
      %s40 = ssub.s32 %s27, %s34
      %s41 = sor.u32 %s39, %s40
      %p42 = scmp.eq.s32.totalorder %s41, 0
      %s44 = sadd.s32 %s43, 1
      %s45 = scalar_select %p42, %s43, %s44
      %p48 = pneg %p42
      %p49 = scmp.eq.s32.totalorder %s19, 1
      %p50 = por %p48, %p49
      %p51 = scmp.ne.s32.totalorder %s43, %s46
      %p52 = scmp.eq.s32.totalorder %s19, 0
      %p53 = por %p51, %p52
      %p54 = scmp.ne.s32.totalorder %s43, %s46
      %p55 = scmp.eq.s32.totalorder %s24, 1
      %p56 = por %p54, %p55
      %p57 = scmp.ne.s32.totalorder %s46, %s47
      %p58 = scmp.eq.s32.totalorder %s24, 0
      %p59 = por %p57, %p58
      %p60 = scmp.ne.s32.totalorder %s46, %s47
      %p61 = scmp.eq.s32.totalorder %s25, 1
      %p62 = por %p60, %p61
      %p64 = scmp.ne.s32.totalorder %s47, %s63
      %p65 = scmp.eq.s32.totalorder %s25, 0
      %p66 = por %p64, %p65
      %s68 = sadd.s32 %s67, 1
      %p71 = scmp.eq.s32.totalorder %s19, 1
      %p72 = scmp.ne.s32.totalorder %s67, %s69
      %p73 = scmp.eq.s32.totalorder %s19, 0
      %p74 = por %p72, %p73
      %p75 = scmp.ne.s32.totalorder %s67, %s69
      %p76 = scmp.eq.s32.totalorder %s24, 1
      %p77 = por %p75, %p76
      %p78 = scmp.ne.s32.totalorder %s69, %s70
      %p79 = scmp.eq.s32.totalorder %s24, 0
      %p80 = por %p78, %p79
      %p81 = scmp.ne.s32.totalorder %s69, %s70
      %p82 = scmp.eq.s32.totalorder %s25, 1
      %p83 = por %p81, %p82
      %p85 = scmp.ne.s32.totalorder %s70, %s84
      %p86 = scmp.eq.s32.totalorder %s25, 0
      %p87 = por %p85, %p86
      %s89 = sadd.s32 %s88, 1
      %p92 = scmp.eq.s32.totalorder %s19, 1
      %p93 = scmp.ne.s32.totalorder %s88, %s90
      %p94 = scmp.eq.s32.totalorder %s19, 0
      %p95 = por %p93, %p94
      %p96 = scmp.ne.s32.totalorder %s88, %s90
      %p97 = scmp.eq.s32.totalorder %s24, 1
      %p98 = por %p96, %p97
      %p99 = scmp.ne.s32.totalorder %s90, %s91
      %p100 = scmp.eq.s32.totalorder %s24, 0
      %p101 = por %p99, %p100
      %p102 = scmp.ne.s32.totalorder %s90, %s91
      %p103 = scmp.eq.s32.totalorder %s25, 1
      %p104 = por %p102, %p103
      %p106 = scmp.ne.s32.totalorder %s91, %s105
      %p107 = scmp.eq.s32.totalorder %s25, 0
      %p108 = por %p106, %p107
      %s110 = sadd.s32 %s109, 1
      %p113 = scmp.eq.s32.totalorder %s19, 1
      %p114 = scmp.ne.s32.totalorder %s109, %s111
      %p115 = scmp.eq.s32.totalorder %s19, 0
      %p116 = por %p114, %p115
      %p117 = scmp.ne.s32.totalorder %s109, %s111
      %p118 = scmp.eq.s32.totalorder %s24, 1
      %p119 = por %p117, %p118
      %p120 = scmp.ne.s32.totalorder %s111, %s112
      %p121 = scmp.eq.s32.totalorder %s24, 0
      %p122 = por %p120, %p121
      %p123 = scmp.ne.s32.totalorder %s111, %s112
      %p124 = scmp.eq.s32.totalorder %s25, 1
      %p125 = por %p123, %p124
      %p127 = scmp.ne.s32.totalorder %s112, %s126
      %p128 = scmp.eq.s32.totalorder %s25, 0
      %p129 = por %p127, %p128
      %s131 = sadd.s32 %s130, 1
      %p134 = scmp.eq.s32.totalorder %s19, 1
      %p135 = scmp.ne.s32.totalorder %s130, %s132
      %p136 = scmp.eq.s32.totalorder %s19, 0
      %p137 = por %p135, %p136
      %p138 = scmp.ne.s32.totalorder %s130, %s132
      %p139 = scmp.eq.s32.totalorder %s24, 1
      %p140 = por %p138, %p139
      %p141 = scmp.ne.s32.totalorder %s132, %s133
      %p142 = scmp.eq.s32.totalorder %s24, 0
      %p143 = por %p141, %p142
      %p144 = scmp.ne.s32.totalorder %s132, %s133
      %p145 = scmp.eq.s32.totalorder %s25, 1
      %p146 = por %p144, %p145
      %p148 = scmp.ne.s32.totalorder %s133, %s147
      %p149 = scmp.eq.s32.totalorder %s25, 0
      %p150 = por %p148, %p149
      %s152 = sadd.s32 %s151, 1
      %p155 = scmp.eq.s32.totalorder %s19, 1
      %p156 = scmp.ne.s32.totalorder %s151, %s153
      %p157 = scmp.eq.s32.totalorder %s19, 0
      %p158 = por %p156, %p157
      %p159 = scmp.ne.s32.totalorder %s151, %s153
      %p160 = scmp.eq.s32.totalorder %s24, 1
      %p161 = por %p159, %p160
      %p162 = scmp.ne.s32.totalorder %s153, %s154
      %p163 = scmp.eq.s32.totalorder %s24, 0
      %p164 = por %p162, %p163
      %p165 = scmp.ne.s32.totalorder %s153, %s154
      %p166 = scmp.eq.s32.totalorder %s25, 1
      %p167 = por %p165, %p166
      %p169 = scmp.ne.s32.totalorder %s154, %s168
      %p170 = scmp.eq.s32.totalorder %s25, 0
      %p171 = por %p169, %p170
      %s172 = ssub.s32 %s26, %s38
      %s173 = ssub.s32 %s27, %s34
      %s174 = sor.u32 %s172, %s173
      %p175 = scmp.eq.s32.totalorder %s174, 0
      %s177 = sadd.s32 %s176, 1
      %s178 = scalar_select %p175, %s176, %s177
      %p181 = pneg %p175
      %p182 = scmp.eq.s32.totalorder %s19, 1
      %p183 = por %p181, %p182
      %p184 = scmp.ne.s32.totalorder %s176, %s179
      %p185 = scmp.eq.s32.totalorder %s19, 0
      %p186 = por %p184, %p185
      %p187 = scmp.ne.s32.totalorder %s176, %s179
      %p188 = scmp.eq.s32.totalorder %s24, 1
      %p189 = por %p187, %p188
      %p190 = scmp.ne.s32.totalorder %s179, %s180
      %p191 = scmp.eq.s32.totalorder %s24, 0
      %p192 = por %p190, %p191
      %p193 = scmp.ne.s32.totalorder %s179, %s180
      %p194 = scmp.eq.s32.totalorder %s25, 1
      %p195 = por %p193, %p194
      %p197 = scmp.ne.s32.totalorder %s180, %s196
      %p198 = scmp.eq.s32.totalorder %s25, 0
      %p199 = por %p197, %p198
      %p200 = scmp.le.s32.totalorder 1, %s19
      %p201 = scmp.lt.s32.totalorder %s19, 3
      %p202 = pnand %p200, %p201
      %p203 = pneg %p202
      // Predicated region
      $region9: #{tpu_custom_call.1} parent=5 // pred_check
        _
      $region10: #{tpu_custom_call.1} parent=5 // pred_check_branch
        %205 = sbr.rel (%p202) target = $region12
      $region11: #{tpu_custom_call.1} parent=5 // pred_region
        %s206 = ssub.s32 %s19, 1
        // Predicated region
        $region13: #{tpu_custom_call.1} parent=11 // pred_check
          %p207 = pneg %p80
        $region14: #{tpu_custom_call.1} parent=11 // pred_check_branch
          %209 = sbr.rel (%p207) target = $region16
        $region15: #{tpu_custom_call.1} parent=11 // pred_region
          %s211 = ssub.s32 16, 16
          %212 = vsyncadd [#allocation5], %s211
          %s214 = sshll.u32 %s1, 4
          %s215 = int_to_ptr.vmem [resolvable:$true] %s214
          %217 = dma.vmem_to_smem %s215, 16, [#allocation3], [#allocation5]
        $region16: #{tpu_custom_call.1} parent=11 // pred_fallthru
          _
        // Predicated region
        $region17: #{tpu_custom_call.1} parent=11 // pred_check
          %p218 = pneg %p101
        $region18: #{tpu_custom_call.1} parent=11 // pred_check_branch
          %220 = sbr.rel (%p218) target = $region20
        $region19: #{tpu_custom_call.1} parent=11 // pred_region
          %s222 = ssub.s32 16, 16
          %223 = vsyncadd [#allocation7], %s222
          %s225 = sshll.u32 %s2, 4
          %s226 = int_to_ptr.vmem [resolvable:$true] %s225
          %228 = dma.vmem_to_smem %s226, 16, [#allocation6], [#allocation7]
        $region20: #{tpu_custom_call.1} parent=11 // pred_fallthru
          _
        // Predicated region
        $region21: #{tpu_custom_call.1} parent=11 // pred_check
          %p229 = pneg %p122
        $region22: #{tpu_custom_call.1} parent=11 // pred_check_branch
          %231 = sbr.rel (%p229) target = $region24
        $region23: #{tpu_custom_call.1} parent=11 // pred_region
          _
        $region24: #{tpu_custom_call.1} parent=11 // pred_fallthru
          _
        // Predicated region
        $region25: #{tpu_custom_call.1} parent=11 // pred_check
          %p232 = pneg %p143
        $region26: #{tpu_custom_call.1} parent=11 // pred_check_branch
          %234 = sbr.rel (%p232) target = $region28
        $region27: #{tpu_custom_call.1} parent=11 // pred_region
          %s236 = ssub.s32 16, 16
          %237 = vsyncadd [#allocation7], %s236
          %s239 = sshll.u32 %s4, 4
          %s240 = int_to_ptr.vmem [resolvable:$true] %s239
          %242 = dma.vmem_to_smem %s240, 16, [#allocation8], [#allocation7]
        $region28: #{tpu_custom_call.1} parent=11 // pred_fallthru
          _
        // Predicated region
        $region29: #{tpu_custom_call.1} parent=11 // pred_check
          %p243 = pneg %p164
        $region30: #{tpu_custom_call.1} parent=11 // pred_check_branch
          %245 = sbr.rel (%p243) target = $region32
        $region31: #{tpu_custom_call.1} parent=11 // pred_region
          %s247 = ssub.s32 16, 16
          %248 = vsyncadd [#allocation10], %s247
          %s250 = sshll.u32 %s5, 4
          %s251 = int_to_ptr.vmem [resolvable:$true] %s250
          %253 = dma.vmem_to_smem %s251, 16, [#allocation9], [#allocation10]
        $region32: #{tpu_custom_call.1} parent=11 // pred_fallthru
          _
      $region12: #{tpu_custom_call.1} parent=5 // pred_fallthru
        _
      %p254 = scmp.lt.s32.totalorder %s19, 2
      // Predicated region
      $region33: #{tpu_custom_call.1} parent=5 // pred_check
        %p255 = pneg %p254
      $region34: #{tpu_custom_call.1} parent=5 // pred_check_branch
        %257 = sbr.rel (%p255) target = $region36
      $region35: #{tpu_custom_call.1} parent=5 // pred_region
        // Predicated region
        $region37: #{tpu_custom_call.1} parent=35 // pred_check
          %p258 = pneg %p53
        $region38: #{tpu_custom_call.1} parent=35 // pred_check_branch
          %260 = sbr.rel (%p258) target = $region40
        $region39: #{tpu_custom_call.1} parent=35 // pred_region
          %p261 = scmp.lt.s32.totalorder %s26, 1
          %s262 = scalar_select %p261, %s26, 1
          %p263 = scmp.lt.s32.totalorder %s27, 0
          %s264 = scalar_select %p263, %s27, 0
          %s265 = smul.addr %s262, 12
          %s266 = sadd.s32 %s264, %s265
          %s267 = smul.addr %s266, 8
          %s268 = scalar_lea.vmem %s0, %s267
        $region40: #{tpu_custom_call.1} parent=35 // pred_fallthru
          _
      $region36: #{tpu_custom_call.1} parent=5 // pred_fallthru
        _
      %p269 = scmp.le.s32.totalorder 1, %s19
      %p270 = scmp.lt.s32.totalorder %s19, 3
      %p271 = pnand %p269, %p270
      %p272 = pneg %p271
      // Predicated region
      $region41: #{tpu_custom_call.1} parent=5 // pred_check
        _
      $region42: #{tpu_custom_call.1} parent=5 // pred_check_branch
        %274 = sbr.rel (%p271) target = $region44
      $region43: #{tpu_custom_call.1} parent=5 // pred_region
        %s275 = ssub.s32 %s19, 1
        // Predicated region
        $region45: #{tpu_custom_call.1} parent=43 // pred_check
          %p276 = pneg %p80
        $region46: #{tpu_custom_call.1} parent=43 // pred_check_branch
          %278 = sbr.rel (%p276) target = $region48
        $region47: #{tpu_custom_call.1} parent=43 // pred_region
          %279 = dma.done [#allocation5], 16
        $region48: #{tpu_custom_call.1} parent=43 // pred_fallthru
          _
        // Predicated region
        $region49: #{tpu_custom_call.1} parent=43 // pred_check
          %p280 = pneg %p101
        $region50: #{tpu_custom_call.1} parent=43 // pred_check_branch
          %282 = sbr.rel (%p280) target = $region52
        $region51: #{tpu_custom_call.1} parent=43 // pred_region
          %283 = dma.done [#allocation7], 16
        $region52: #{tpu_custom_call.1} parent=43 // pred_fallthru
          _
        // Predicated region
        $region53: #{tpu_custom_call.1} parent=43 // pred_check
          %p284 = pneg %p143
        $region54: #{tpu_custom_call.1} parent=43 // pred_check_branch
          %286 = sbr.rel (%p284) target = $region56
        $region55: #{tpu_custom_call.1} parent=43 // pred_region
          %287 = dma.done [#allocation7], 16
        $region56: #{tpu_custom_call.1} parent=43 // pred_fallthru
          _
        // Predicated region
        $region57: #{tpu_custom_call.1} parent=43 // pred_check
          %p288 = pneg %p164
        $region58: #{tpu_custom_call.1} parent=43 // pred_check_branch
          %290 = sbr.rel (%p288) target = $region60
        $region59: #{tpu_custom_call.1} parent=43 // pred_region
          %291 = dma.done [#allocation10], 16
        $region60: #{tpu_custom_call.1} parent=43 // pred_fallthru
          _
        %292 = sfence
        %p293 = scmp.lt.s32.totalorder %s28, 1
        %s294 = scalar_select %p293, %s28, 1
        %p295 = scmp.lt.s32.totalorder %s29, 0
        %s296 = scalar_select %p295, %s29, 0
        %s297 = smul.addr %s294, 12
        %s298 = sadd.s32 %s296, %s297
        %s299 = smul.addr %s298, 8
        %s300 = scalar_lea.vmem %s0, %s299
        %p301 = pneg %p59
        %p302 = pneg %p56
        %p303 = pneg %p80
        %p304 = pneg %p77
        %p305 = pneg %p101
        %p306 = pneg %p98
        %p307 = pneg %p122
        %p308 = pneg %p119
        %p309 = pneg %p143
        %p310 = pneg %p140
        %p311 = pneg %p164
        %p312 = pneg %p161
        %p313 = pneg %p192
        %p314 = pneg %p189
        %s315 = sand.u32 %s179, 1
        %s316 = scalar_lea.sflag [#allocation4], %s315
        %s317 = sand.u32 %s179, 1
        %s318 = smul.addr %s317, 64
        %s319 = scalar_lea.vmem [#allocation11], %s318
        %p320 = scmp.lt.s32.totalorder %s28, 1
        %s321 = scalar_select %p320, %s28, 1
        %p322 = scmp.lt.s32.totalorder %s29, 0
        %s323 = scalar_select %p322, %s29, 0
        %s324 = smul.addr %s321, 12
        %s325 = sadd.s32 %s323, %s324
        %s326 = smul.addr %s325, 8
        %s327 = scalar_lea.vmem %s0, %s326
        %s328 = sld [smem:[#allocation2]]
        %v329 = vld [vmem:[%s327] sm:$0xff]
        %v330 = vld [vmem:[%s327 + $0x8] sm:$0xff]
        %v331 = vld [vmem:[%s327 + $0x10] sm:$0xff]
        %s332 = scalar_lea.vmem %s327, 24
        %v333 = vld [vmem:[%s332] sm:$0xff]
        %v334 = vld [vmem:[%s332 + $0x8] sm:$0xff]
        %v335 = vld [vmem:[%s332 + $0x10] sm:$0xff]
        %s336 = scalar_lea.vmem %s327, 48
        %v337 = vld [vmem:[%s336] sm:$0xff]
        %v338 = vld [vmem:[%s336 + $0x8] sm:$0xff]
        %v339 = vld [vmem:[%s336 + $0x10] sm:$0xff]
        %s340 = scalar_lea.vmem %s327, 72
        %v341 = vld [vmem:[%s340] sm:$0xff]
        %v342 = vld [vmem:[%s340 + $0x8] sm:$0xff]
        %v343 = vld [vmem:[%s340 + $0x10] sm:$0xff]
        %v344 = vmul.f32 %v329, %v329
        %v345 = vmul.f32 %v330, %v330
        %v346 = vmul.f32 %v331, %v331
        %v347 = vmul.f32 %v333, %v333
        %v348 = vmul.f32 %v334, %v334
        %v349 = vmul.f32 %v335, %v335
        %v350 = vmul.f32 %v337, %v337
        %v351 = vmul.f32 %v338, %v338
        %v352 = vmul.f32 %v339, %v339
        %v353 = vmul.f32 %v341, %v341
        %v354 = vmul.f32 %v342, %v342
        %v355 = vmul.f32 %v343, %v343
        %v356 = vadd.f32 %v344, %v347
        %v357 = vadd.f32 %v345, %v348
        %v358 = vadd.f32 %v346, %v349
        %v359 = vadd.f32 %v350, %v353
        %v360 = vadd.f32 %v351, %v354
        %v361 = vadd.f32 %v352, %v355
        %v362 = vadd.f32 %v356, %v359
        %v363 = vadd.f32 %v357, %v360
        %v364 = vadd.f32 %v358, %v361
        %v365 = vlaneseq
        %v366 = vshrl.u32 %v365, 7
        %v367 = vadd.s32 %v366, 8
        %v368 = vadd.s32 %v366, 16
        %vm369 = vcmp.lt.s32.totalorder %v366, 16
        %vm370 = vcmp.lt.s32.totalorder %v367, 16
        %vm371 = vcmp.lt.s32.totalorder %v368, 16
        %v372 = vrot.slane %v362, 7
        %v373 = vrot.slane %v363, 7
        %v374 = vrot.slane %v364, 7
        %vm375 = vcmp.lt.s32.totalorder %v366, 1
        %v376 = vsel %vm375, %v373, %v374
        %v377 = vsel %vm375, %v372, %v373
        %v378 = vsel %vm375, %v374, %v372
        %v379 = vrot.slane %v362, 1
        %v380 = vrot.slane %v363, 1
        %v381 = vrot.slane %v364, 1
        %vm382 = vcmp.lt.s32.totalorder %v366, 7
        %v383 = vsel %vm382, %v380, %v381
        %v384 = vsel %vm382, %v379, %v380
        %v385 = vsel %vm382, %v381, %v379
        %s386 = sld [smem:[#allocation3]]
        %v387 = vstv %s386
        %v388 = vmul.f32 %v387, %v378
        %v389 = vmul.f32 %v387, %v377
        %v390 = vmul.f32 %v387, %v376
        %s391 = sld [smem:[#allocation3 + $0x1]]
        %v392 = vstv %s391
        %v393 = vmul.f32 %v392, %v362
        %v394 = vmul.f32 %v392, %v363
        %v395 = vmul.f32 %v392, %v364
        %v396 = vadd.f32 %v388, %v393
        %v397 = vadd.f32 %v389, %v394
        %v398 = vadd.f32 %v390, %v395
        %s399 = sld [smem:[#allocation3 + $0x2]]
        %v400 = vstv %s399
        %v401 = vmul.f32 %v400, %v384
        %v402 = vmul.f32 %v400, %v383
        %v403 = vmul.f32 %v400, %v385
        %v404 = vadd.f32 %v396, %v401
        %v405 = vadd.f32 %v397, %v402
        %v406 = vadd.f32 %v398, %v403
        %s407 = sld [smem:[#allocation6]]
        %v408 = vstv %s407
        %v409 = vadd.f32 %v404, %v408
        %v410 = vadd.f32 %v405, %v408
        %v411 = vadd.f32 %v406, %v408
        %vm412 = vcmp.ge.f32.partialorder %v409, 0.0
        %vm413 = vcmp.ge.f32.partialorder %v410, 0.0
        %vm414 = vcmp.ge.f32.partialorder %v411, 0.0
        %v415 = vstv %s328
        %v416 = vmul.f32 %v415, %v409
        %v417 = vmul.f32 %v415, %v410
        %v418 = vmul.f32 %v415, %v411
        %v419 = vsel %vm412, %v409, %v416
        %v420 = vsel %vm413, %v410, %v417
        %v421 = vsel %vm414, %v411, %v418
        %v422 = vsel %vm369, %v419, 0.0
        %v423 = vsel %vm370, %v420, 0.0
        %v424 = vsel %vm371, %v421, 0.0
        %s425 = sld [smem:[#allocation3 + $0x3]]
        %v426 = vstv %s425
        %v427 = vmul.f32 %v426, %v378
        %v428 = vmul.f32 %v426, %v377
        %v429 = vmul.f32 %v426, %v376
        %s430 = sld [smem:[#allocation3 + $0x4]]
        %v431 = vstv %s430
        %v432 = vmul.f32 %v431, %v362
        %v433 = vmul.f32 %v431, %v363
        %v434 = vmul.f32 %v431, %v364
        %v435 = vadd.f32 %v427, %v432
        %v436 = vadd.f32 %v428, %v433
        %v437 = vadd.f32 %v429, %v434
        %s438 = sld [smem:[#allocation3 + $0x5]]
        %v439 = vstv %s438
        %v440 = vmul.f32 %v439, %v384
        %v441 = vmul.f32 %v439, %v383
        %v442 = vmul.f32 %v439, %v385
        %v443 = vadd.f32 %v435, %v440
        %v444 = vadd.f32 %v436, %v441
        %v445 = vadd.f32 %v437, %v442
        %s446 = sld [smem:[#allocation6 + $0x1]]
        %v447 = vstv %s446
        %v448 = vadd.f32 %v443, %v447
        %v449 = vadd.f32 %v444, %v447
        %v450 = vadd.f32 %v445, %v447
        %vm451 = vcmp.ge.f32.partialorder %v448, 0.0
        %vm452 = vcmp.ge.f32.partialorder %v449, 0.0
        %vm453 = vcmp.ge.f32.partialorder %v450, 0.0
        %v454 = vmul.f32 %v415, %v448
        %v455 = vmul.f32 %v415, %v449
        %v456 = vmul.f32 %v415, %v450
        %v457 = vsel %vm451, %v448, %v454
        %v458 = vsel %vm452, %v449, %v455
        %v459 = vsel %vm453, %v450, %v456
        %v460 = vsel %vm369, %v457, 0.0
        %v461 = vsel %vm370, %v458, 0.0
        %v462 = vsel %vm371, %v459, 0.0
        %s463 = sld [smem:[#allocation3 + $0x6]]
        %v464 = vstv %s463
        %v465 = vmul.f32 %v464, %v378
        %v466 = vmul.f32 %v464, %v377
        %v467 = vmul.f32 %v464, %v376
        %s468 = sld [smem:[#allocation3 + $0x7]]
        %v469 = vstv %s468
        %v470 = vmul.f32 %v469, %v362
        %v471 = vmul.f32 %v469, %v363
        %v472 = vmul.f32 %v469, %v364
        %v473 = vadd.f32 %v465, %v470
        %v474 = vadd.f32 %v466, %v471
        %v475 = vadd.f32 %v467, %v472
        %s476 = sld [smem:[#allocation3 + $0x8]]
        %v477 = vstv %s476
        %v478 = vmul.f32 %v477, %v384
        %v479 = vmul.f32 %v477, %v383
        %v480 = vmul.f32 %v477, %v385
        %v481 = vadd.f32 %v473, %v478
        %v482 = vadd.f32 %v474, %v479
        %v483 = vadd.f32 %v475, %v480
        %s484 = sld [smem:[#allocation6 + $0x2]]
        %v485 = vstv %s484
        %v486 = vadd.f32 %v481, %v485
        %v487 = vadd.f32 %v482, %v485
        %v488 = vadd.f32 %v483, %v485
        %vm489 = vcmp.ge.f32.partialorder %v486, 0.0
        %vm490 = vcmp.ge.f32.partialorder %v487, 0.0
        %vm491 = vcmp.ge.f32.partialorder %v488, 0.0
        %v492 = vmul.f32 %v415, %v486
        %v493 = vmul.f32 %v415, %v487
        %v494 = vmul.f32 %v415, %v488
        %v495 = vsel %vm489, %v486, %v492
        %v496 = vsel %vm490, %v487, %v493
        %v497 = vsel %vm491, %v488, %v494
        %v498 = vsel %vm369, %v495, 0.0
        %v499 = vsel %vm370, %v496, 0.0
        %v500 = vsel %vm371, %v497, 0.0
        %s501 = sld [smem:[#allocation3 + $0x9]]
        %v502 = vstv %s501
        %v503 = vmul.f32 %v502, %v378
        %v504 = vmul.f32 %v502, %v377
        %v505 = vmul.f32 %v502, %v376
        %s506 = sld [smem:[#allocation3 + $0xa]]
        %v507 = vstv %s506
        %v508 = vmul.f32 %v507, %v362
        %v509 = vmul.f32 %v507, %v363
        %v510 = vmul.f32 %v507, %v364
        %v511 = vadd.f32 %v503, %v508
        %v512 = vadd.f32 %v504, %v509
        %v513 = vadd.f32 %v505, %v510
        %s514 = sld [smem:[#allocation3 + $0xb]]
        %v515 = vstv %s514
        %v516 = vmul.f32 %v515, %v384
        %v517 = vmul.f32 %v515, %v383
        %v518 = vmul.f32 %v515, %v385
        %v519 = vadd.f32 %v511, %v516
        %v520 = vadd.f32 %v512, %v517
        %v521 = vadd.f32 %v513, %v518
        %s522 = sld [smem:[#allocation6 + $0x3]]
        %v523 = vstv %s522
        %v524 = vadd.f32 %v519, %v523
        %v525 = vadd.f32 %v520, %v523
        %v526 = vadd.f32 %v521, %v523
        %vm527 = vcmp.ge.f32.partialorder %v524, 0.0
        %vm528 = vcmp.ge.f32.partialorder %v525, 0.0
        %vm529 = vcmp.ge.f32.partialorder %v526, 0.0
        %v530 = vmul.f32 %v415, %v524
        %v531 = vmul.f32 %v415, %v525
        %v532 = vmul.f32 %v415, %v526
        %v533 = vsel %vm527, %v524, %v530
        %v534 = vsel %vm528, %v525, %v531
        %v535 = vsel %vm529, %v526, %v532
        %v536 = vsel %vm369, %v533, 0.0
        %v537 = vsel %vm370, %v534, 0.0
        %v538 = vsel %vm371, %v535, 0.0
        %v539 = vrot.slane %v422, 4
        %v540 = vrot.slane %v423, 4
        %v541 = vrot.slane %v424, 4
        %vm542 = vcmp.lt.s32.totalorder %v366, 4
        %v543 = vsel %vm542, %v539, %v540
        %v544 = vsel %vm542, %v541, %v539
        %s545 = sld [smem:[#allocation8]]
        %v546 = vstv %s545
        %v547 = vmul.f32 %v546, %v544
        %v548 = vmul.f32 %v546, %v543
        %s549 = sld [smem:[#allocation8 + $0x14]]
        %v550 = vstv %s549
        %v551 = vmul.f32 %v550, %v544
        %v552 = vmul.f32 %v550, %v543
        %s553 = sld [smem:[#allocation8 + $0x28]]
        %v554 = vstv %s553
        %v555 = vmul.f32 %v554, %v544
        %v556 = vmul.f32 %v554, %v543
        %s557 = sld [smem:[#allocation8 + $0x3c]]
        %v558 = vstv %s557
        %v559 = vmul.f32 %v558, %v544
        %v560 = vmul.f32 %v558, %v543
        %v561 = vrot.slane %v460, 4
        %v562 = vrot.slane %v461, 4
        %v563 = vrot.slane %v462, 4
        %v564 = vsel %vm542, %v561, %v562
        %v565 = vsel %vm542, %v563, %v561
        %s566 = sld [smem:[#allocation8 + $0x5]]
        %v567 = vstv %s566
        %v568 = vmul.f32 %v567, %v565
        %v569 = vmul.f32 %v567, %v564
        %v570 = vadd.f32 %v547, %v568
        %v571 = vadd.f32 %v548, %v569
        %s572 = sld [smem:[#allocation8 + $0x19]]
        %v573 = vstv %s572
        %v574 = vmul.f32 %v573, %v565
        %v575 = vmul.f32 %v573, %v564
        %v576 = vadd.f32 %v551, %v574
        %v577 = vadd.f32 %v552, %v575
        %s578 = sld [smem:[#allocation8 + $0x2d]]
        %v579 = vstv %s578
        %v580 = vmul.f32 %v579, %v565
        %v581 = vmul.f32 %v579, %v564
        %v582 = vadd.f32 %v555, %v580
        %v583 = vadd.f32 %v556, %v581
        %s584 = sld [smem:[#allocation8 + $0x41]]
        %v585 = vstv %s584
        %v586 = vmul.f32 %v585, %v565
        %v587 = vmul.f32 %v585, %v564
        %v588 = vadd.f32 %v559, %v586
        %v589 = vadd.f32 %v560, %v587
        %v590 = vrot.slane %v498, 4
        %v591 = vrot.slane %v499, 4
        %v592 = vrot.slane %v500, 4
        %v593 = vsel %vm542, %v590, %v591
        %v594 = vsel %vm542, %v592, %v590
        %s595 = sld [smem:[#allocation8 + $0xa]]
        %v596 = vstv %s595
        %v597 = vmul.f32 %v596, %v594
        %v598 = vmul.f32 %v596, %v593
        %v599 = vadd.f32 %v570, %v597
        %v600 = vadd.f32 %v571, %v598
        %s601 = sld [smem:[#allocation8 + $0x1e]]
        %v602 = vstv %s601
        %v603 = vmul.f32 %v602, %v594
        %v604 = vmul.f32 %v602, %v593
        %v605 = vadd.f32 %v576, %v603
        %v606 = vadd.f32 %v577, %v604
        %s607 = sld [smem:[#allocation8 + $0x32]]
        %v608 = vstv %s607
        %v609 = vmul.f32 %v608, %v594
        %v610 = vmul.f32 %v608, %v593
        %v611 = vadd.f32 %v582, %v609
        %v612 = vadd.f32 %v583, %v610
        %s613 = sld [smem:[#allocation8 + $0x46]]
        %v614 = vstv %s613
        %v615 = vmul.f32 %v614, %v594
        %v616 = vmul.f32 %v614, %v593
        %v617 = vadd.f32 %v588, %v615
        %v618 = vadd.f32 %v589, %v616
        %v619 = vrot.slane %v536, 4
        %v620 = vrot.slane %v537, 4
        %v621 = vrot.slane %v538, 4
        %v622 = vsel %vm542, %v619, %v620
        %v623 = vsel %vm542, %v621, %v619
        %s624 = sld [smem:[#allocation8 + $0xf]]
        %v625 = vstv %s624
        %v626 = vmul.f32 %v625, %v623
        %v627 = vmul.f32 %v625, %v622
        %v628 = vadd.f32 %v599, %v626
        %v629 = vadd.f32 %v600, %v627
        %s630 = sld [smem:[#allocation8 + $0x23]]
        %v631 = vstv %s630
        %v632 = vmul.f32 %v631, %v623
        %v633 = vmul.f32 %v631, %v622
        %v634 = vadd.f32 %v605, %v632
        %v635 = vadd.f32 %v606, %v633
        %s636 = sld [smem:[#allocation8 + $0x37]]
        %v637 = vstv %s636
        %v638 = vmul.f32 %v637, %v623
        %v639 = vmul.f32 %v637, %v622
        %v640 = vadd.f32 %v611, %v638
        %v641 = vadd.f32 %v612, %v639
        %s642 = sld [smem:[#allocation8 + $0x4b]]
        %v643 = vstv %s642
        %v644 = vmul.f32 %v643, %v623
        %v645 = vmul.f32 %v643, %v622
        %v646 = vadd.f32 %v617, %v644
        %v647 = vadd.f32 %v618, %v645
        %v648 = vrot.slane %v422, 6
        %v649 = vrot.slane %v423, 6
        %v650 = vrot.slane %v424, 6
        %vm651 = vcmp.lt.s32.totalorder %v366, 2
        %v652 = vsel %vm651, %v648, %v649
        %v653 = vsel %vm651, %v650, %v648
        %s654 = sld [smem:[#allocation8 + $0x1]]
        %v655 = vstv %s654
        %v656 = vmul.f32 %v655, %v653
        %v657 = vmul.f32 %v655, %v652
        %v658 = vadd.f32 %v628, %v656
        %v659 = vadd.f32 %v629, %v657
        %s660 = sld [smem:[#allocation8 + $0x15]]
        %v661 = vstv %s660
        %v662 = vmul.f32 %v661, %v653
        %v663 = vmul.f32 %v661, %v652
        %v664 = vadd.f32 %v634, %v662
        %v665 = vadd.f32 %v635, %v663
        %s666 = sld [smem:[#allocation8 + $0x29]]
        %v667 = vstv %s666
        %v668 = vmul.f32 %v667, %v653
        %v669 = vmul.f32 %v667, %v652
        %v670 = vadd.f32 %v640, %v668
        %v671 = vadd.f32 %v641, %v669
        %s672 = sld [smem:[#allocation8 + $0x3d]]
        %v673 = vstv %s672
        %v674 = vmul.f32 %v673, %v653
        %v675 = vmul.f32 %v673, %v652
        %v676 = vadd.f32 %v646, %v674
        %v677 = vadd.f32 %v647, %v675
        %v678 = vrot.slane %v460, 6
        %v679 = vrot.slane %v461, 6
        %v680 = vrot.slane %v462, 6
        %v681 = vsel %vm651, %v678, %v679
        %v682 = vsel %vm651, %v680, %v678
        %s683 = sld [smem:[#allocation8 + $0x6]]
        %v684 = vstv %s683
        %v685 = vmul.f32 %v684, %v682
        %v686 = vmul.f32 %v684, %v681
        %v687 = vadd.f32 %v658, %v685
        %v688 = vadd.f32 %v659, %v686
        %s689 = sld [smem:[#allocation8 + $0x1a]]
        %v690 = vstv %s689
        %v691 = vmul.f32 %v690, %v682
        %v692 = vmul.f32 %v690, %v681
        %v693 = vadd.f32 %v664, %v691
        %v694 = vadd.f32 %v665, %v692
        %s695 = sld [smem:[#allocation8 + $0x2e]]
        %v696 = vstv %s695
        %v697 = vmul.f32 %v696, %v682
        %v698 = vmul.f32 %v696, %v681
        %v699 = vadd.f32 %v670, %v697
        %v700 = vadd.f32 %v671, %v698
        %s701 = sld [smem:[#allocation8 + $0x42]]
        %v702 = vstv %s701
        %v703 = vmul.f32 %v702, %v682
        %v704 = vmul.f32 %v702, %v681
        %v705 = vadd.f32 %v676, %v703
        %v706 = vadd.f32 %v677, %v704
        %v707 = vrot.slane %v498, 6
        %v708 = vrot.slane %v499, 6
        %v709 = vrot.slane %v500, 6
        %v710 = vsel %vm651, %v707, %v708
        %v711 = vsel %vm651, %v709, %v707
        %s712 = sld [smem:[#allocation8 + $0xb]]
        %v713 = vstv %s712
        %v714 = vmul.f32 %v713, %v711
        %v715 = vmul.f32 %v713, %v710
        %v716 = vadd.f32 %v687, %v714
        %v717 = vadd.f32 %v688, %v715
        %s718 = sld [smem:[#allocation8 + $0x1f]]
        %v719 = vstv %s718
        %v720 = vmul.f32 %v719, %v711
        %v721 = vmul.f32 %v719, %v710
        %v722 = vadd.f32 %v693, %v720
        %v723 = vadd.f32 %v694, %v721
        %s724 = sld [smem:[#allocation8 + $0x33]]
        %v725 = vstv %s724
        %v726 = vmul.f32 %v725, %v711
        %v727 = vmul.f32 %v725, %v710
        %v728 = vadd.f32 %v699, %v726
        %v729 = vadd.f32 %v700, %v727
        %s730 = sld [smem:[#allocation8 + $0x47]]
        %v731 = vstv %s730
        %v732 = vmul.f32 %v731, %v711
        %v733 = vmul.f32 %v731, %v710
        %v734 = vadd.f32 %v705, %v732
        %v735 = vadd.f32 %v706, %v733
        %v736 = vrot.slane %v536, 6
        %v737 = vrot.slane %v537, 6
        %v738 = vrot.slane %v538, 6
        %v739 = vsel %vm651, %v736, %v737
        %v740 = vsel %vm651, %v738, %v736
        %s741 = sld [smem:[#allocation8 + $0x10]]
        %v742 = vstv %s741
        %v743 = vmul.f32 %v742, %v740
        %v744 = vmul.f32 %v742, %v739
        %v745 = vadd.f32 %v716, %v743
        %v746 = vadd.f32 %v717, %v744
        %s747 = sld [smem:[#allocation8 + $0x24]]
        %v748 = vstv %s747
        %v749 = vmul.f32 %v748, %v740
        %v750 = vmul.f32 %v748, %v739
        %v751 = vadd.f32 %v722, %v749
        %v752 = vadd.f32 %v723, %v750
        %s753 = sld [smem:[#allocation8 + $0x38]]
        %v754 = vstv %s753
        %v755 = vmul.f32 %v754, %v740
        %v756 = vmul.f32 %v754, %v739
        %v757 = vadd.f32 %v728, %v755
        %v758 = vadd.f32 %v729, %v756
        %s759 = sld [smem:[#allocation8 + $0x4c]]
        %v760 = vstv %s759
        %v761 = vmul.f32 %v760, %v740
        %v762 = vmul.f32 %v760, %v739
        %v763 = vadd.f32 %v734, %v761
        %v764 = vadd.f32 %v735, %v762
        %s765 = sld [smem:[#allocation8 + $0x2]]
        %v766 = vstv %s765
        %v767 = vmul.f32 %v766, %v422
        %v768 = vmul.f32 %v766, %v423
        %v769 = vadd.f32 %v745, %v767
        %v770 = vadd.f32 %v746, %v768
        %s771 = sld [smem:[#allocation8 + $0x16]]
        %v772 = vstv %s771
        %v773 = vmul.f32 %v772, %v422
        %v774 = vmul.f32 %v772, %v423
        %v775 = vadd.f32 %v751, %v773
        %v776 = vadd.f32 %v752, %v774
        %s777 = sld [smem:[#allocation8 + $0x2a]]
        %v778 = vstv %s777
        %v779 = vmul.f32 %v778, %v422
        %v780 = vmul.f32 %v778, %v423
        %v781 = vadd.f32 %v757, %v779
        %v782 = vadd.f32 %v758, %v780
        %s783 = sld [smem:[#allocation8 + $0x3e]]
        %v784 = vstv %s783
        %v785 = vmul.f32 %v784, %v422
        %v786 = vmul.f32 %v784, %v423
        %v787 = vadd.f32 %v763, %v785
        %v788 = vadd.f32 %v764, %v786
        %s789 = sld [smem:[#allocation8 + $0x7]]
        %v790 = vstv %s789
        %v791 = vmul.f32 %v790, %v460
        %v792 = vmul.f32 %v790, %v461
        %v793 = vadd.f32 %v769, %v791
        %v794 = vadd.f32 %v770, %v792
        %s795 = sld [smem:[#allocation8 + $0x1b]]
        %v796 = vstv %s795
        %v797 = vmul.f32 %v796, %v460
        %v798 = vmul.f32 %v796, %v461
        %v799 = vadd.f32 %v775, %v797
        %v800 = vadd.f32 %v776, %v798
        %s801 = sld [smem:[#allocation8 + $0x2f]]
        %v802 = vstv %s801
        %v803 = vmul.f32 %v802, %v460
        %v804 = vmul.f32 %v802, %v461
        %v805 = vadd.f32 %v781, %v803
        %v806 = vadd.f32 %v782, %v804
        %s807 = sld [smem:[#allocation8 + $0x43]]
        %v808 = vstv %s807
        %v809 = vmul.f32 %v808, %v460
        %v810 = vmul.f32 %v808, %v461
        %v811 = vadd.f32 %v787, %v809
        %v812 = vadd.f32 %v788, %v810
        %s813 = sld [smem:[#allocation8 + $0xc]]
        %v814 = vstv %s813
        %v815 = vmul.f32 %v814, %v498
        %v816 = vmul.f32 %v814, %v499
        %v817 = vadd.f32 %v793, %v815
        %v818 = vadd.f32 %v794, %v816
        %s819 = sld [smem:[#allocation8 + $0x20]]
        %v820 = vstv %s819
        %v821 = vmul.f32 %v820, %v498
        %v822 = vmul.f32 %v820, %v499
        %v823 = vadd.f32 %v799, %v821
        %v824 = vadd.f32 %v800, %v822
        %s825 = sld [smem:[#allocation8 + $0x34]]
        %v826 = vstv %s825
        %v827 = vmul.f32 %v826, %v498
        %v828 = vmul.f32 %v826, %v499
        %v829 = vadd.f32 %v805, %v827
        %v830 = vadd.f32 %v806, %v828
        %s831 = sld [smem:[#allocation8 + $0x48]]
        %v832 = vstv %s831
        %v833 = vmul.f32 %v832, %v498
        %v834 = vmul.f32 %v832, %v499
        %v835 = vadd.f32 %v811, %v833
        %v836 = vadd.f32 %v812, %v834
        %s837 = sld [smem:[#allocation8 + $0x11]]
        %v838 = vstv %s837
        %v839 = vmul.f32 %v838, %v536
        %v840 = vmul.f32 %v838, %v537
        %v841 = vadd.f32 %v817, %v839
        %v842 = vadd.f32 %v818, %v840
        %s843 = sld [smem:[#allocation8 + $0x25]]
        %v844 = vstv %s843
        %v845 = vmul.f32 %v844, %v536
        %v846 = vmul.f32 %v844, %v537
        %v847 = vadd.f32 %v823, %v845
        %v848 = vadd.f32 %v824, %v846
        %s849 = sld [smem:[#allocation8 + $0x39]]
        %v850 = vstv %s849
        %v851 = vmul.f32 %v850, %v536
        %v852 = vmul.f32 %v850, %v537
        %v853 = vadd.f32 %v829, %v851
        %v854 = vadd.f32 %v830, %v852
        %s855 = sld [smem:[#allocation8 + $0x4d]]
        %v856 = vstv %s855
        %v857 = vmul.f32 %v856, %v536
        %v858 = vmul.f32 %v856, %v537
        %v859 = vadd.f32 %v835, %v857
        %v860 = vadd.f32 %v836, %v858
        %v861 = vrot.slane %v422, 2
        %v862 = vrot.slane %v423, 2
        %v863 = vrot.slane %v424, 2
        %vm864 = vcmp.lt.s32.totalorder %v366, 6
        %v865 = vsel %vm864, %v862, %v863
        %v866 = vsel %vm864, %v861, %v862
        %s867 = sld [smem:[#allocation8 + $0x3]]
        %v868 = vstv %s867
        %v869 = vmul.f32 %v868, %v866
        %v870 = vmul.f32 %v868, %v865
        %v871 = vadd.f32 %v841, %v869
        %v872 = vadd.f32 %v842, %v870
        %s873 = sld [smem:[#allocation8 + $0x17]]
        %v874 = vstv %s873
        %v875 = vmul.f32 %v874, %v866
        %v876 = vmul.f32 %v874, %v865
        %v877 = vadd.f32 %v847, %v875
        %v878 = vadd.f32 %v848, %v876
        %s879 = sld [smem:[#allocation8 + $0x2b]]
        %v880 = vstv %s879
        %v881 = vmul.f32 %v880, %v866
        %v882 = vmul.f32 %v880, %v865
        %v883 = vadd.f32 %v853, %v881
        %v884 = vadd.f32 %v854, %v882
        %s885 = sld [smem:[#allocation8 + $0x3f]]
        %v886 = vstv %s885
        %v887 = vmul.f32 %v886, %v866
        %v888 = vmul.f32 %v886, %v865
        %v889 = vadd.f32 %v859, %v887
        %v890 = vadd.f32 %v860, %v888
        %v891 = vrot.slane %v460, 2
        %v892 = vrot.slane %v461, 2
        %v893 = vrot.slane %v462, 2
        %v894 = vsel %vm864, %v892, %v893
        %v895 = vsel %vm864, %v891, %v892
        %s896 = sld [smem:[#allocation8 + $0x8]]
        %v897 = vstv %s896
        %v898 = vmul.f32 %v897, %v895
        %v899 = vmul.f32 %v897, %v894
        %v900 = vadd.f32 %v871, %v898
        %v901 = vadd.f32 %v872, %v899
        %s902 = sld [smem:[#allocation8 + $0x1c]]
        %v903 = vstv %s902
        %v904 = vmul.f32 %v903, %v895
        %v905 = vmul.f32 %v903, %v894
        %v906 = vadd.f32 %v877, %v904
        %v907 = vadd.f32 %v878, %v905
        %s908 = sld [smem:[#allocation8 + $0x30]]
        %v909 = vstv %s908
        %v910 = vmul.f32 %v909, %v895
        %v911 = vmul.f32 %v909, %v894
        %v912 = vadd.f32 %v883, %v910
        %v913 = vadd.f32 %v884, %v911
        %s914 = sld [smem:[#allocation8 + $0x44]]
        %v915 = vstv %s914
        %v916 = vmul.f32 %v915, %v895
        %v917 = vmul.f32 %v915, %v894
        %v918 = vadd.f32 %v889, %v916
        %v919 = vadd.f32 %v890, %v917
        %v920 = vrot.slane %v498, 2
        %v921 = vrot.slane %v499, 2
        %v922 = vrot.slane %v500, 2
        %v923 = vsel %vm864, %v921, %v922
        %v924 = vsel %vm864, %v920, %v921
        %s925 = sld [smem:[#allocation8 + $0xd]]
        %v926 = vstv %s925
        %v927 = vmul.f32 %v926, %v924
        %v928 = vmul.f32 %v926, %v923
        %v929 = vadd.f32 %v900, %v927
        %v930 = vadd.f32 %v901, %v928
        %s931 = sld [smem:[#allocation8 + $0x21]]
        %v932 = vstv %s931
        %v933 = vmul.f32 %v932, %v924
        %v934 = vmul.f32 %v932, %v923
        %v935 = vadd.f32 %v906, %v933
        %v936 = vadd.f32 %v907, %v934
        %s937 = sld [smem:[#allocation8 + $0x35]]
        %v938 = vstv %s937
        %v939 = vmul.f32 %v938, %v924
        %v940 = vmul.f32 %v938, %v923
        %v941 = vadd.f32 %v912, %v939
        %v942 = vadd.f32 %v913, %v940
        %s943 = sld [smem:[#allocation8 + $0x49]]
        %v944 = vstv %s943
        %v945 = vmul.f32 %v944, %v924
        %v946 = vmul.f32 %v944, %v923
        %v947 = vadd.f32 %v918, %v945
        %v948 = vadd.f32 %v919, %v946
        %v949 = vrot.slane %v536, 2
        %v950 = vrot.slane %v537, 2
        %v951 = vrot.slane %v538, 2
        %v952 = vsel %vm864, %v950, %v951
        %v953 = vsel %vm864, %v949, %v950
        %s954 = sld [smem:[#allocation8 + $0x12]]
        %v955 = vstv %s954
        %v956 = vmul.f32 %v955, %v953
        %v957 = vmul.f32 %v955, %v952
        %v958 = vadd.f32 %v929, %v956
        %v959 = vadd.f32 %v930, %v957
        %s960 = sld [smem:[#allocation8 + $0x26]]
        %v961 = vstv %s960
        %v962 = vmul.f32 %v961, %v953
        %v963 = vmul.f32 %v961, %v952
        %v964 = vadd.f32 %v935, %v962
        %v965 = vadd.f32 %v936, %v963
        %s966 = sld [smem:[#allocation8 + $0x3a]]
        %v967 = vstv %s966
        %v968 = vmul.f32 %v967, %v953
        %v969 = vmul.f32 %v967, %v952
        %v970 = vadd.f32 %v941, %v968
        %v971 = vadd.f32 %v942, %v969
        %s972 = sld [smem:[#allocation8 + $0x4e]]
        %v973 = vstv %s972
        %v974 = vmul.f32 %v973, %v953
        %v975 = vmul.f32 %v973, %v952
        %v976 = vadd.f32 %v947, %v974
        %v977 = vadd.f32 %v948, %v975
        %v978 = vsel %vm542, %v540, %v541
        %s979 = sld [smem:[#allocation8 + $0x4]]
        %v980 = vstv %s979
        %v981 = vmul.f32 %v980, %v543
        %v982 = vmul.f32 %v980, %v978
        %v983 = vadd.f32 %v958, %v981
        %v984 = vadd.f32 %v959, %v982
        %s985 = sld [smem:[#allocation8 + $0x18]]
        %v986 = vstv %s985
        %v987 = vmul.f32 %v986, %v543
        %v988 = vmul.f32 %v986, %v978
        %v989 = vadd.f32 %v964, %v987
        %v990 = vadd.f32 %v965, %v988
        %s991 = sld [smem:[#allocation8 + $0x2c]]
        %v992 = vstv %s991
        %v993 = vmul.f32 %v992, %v543
        %v994 = vmul.f32 %v992, %v978
        %v995 = vadd.f32 %v970, %v993
        %v996 = vadd.f32 %v971, %v994
        %s997 = sld [smem:[#allocation8 + $0x40]]
        %v998 = vstv %s997
        %v999 = vmul.f32 %v998, %v543
        %v1000 = vmul.f32 %v998, %v978
        %v1001 = vadd.f32 %v976, %v999
        %v1002 = vadd.f32 %v977, %v1000
        %v1003 = vsel %vm542, %v562, %v563
        %s1004 = sld [smem:[#allocation8 + $0x9]]
        %v1005 = vstv %s1004
        %v1006 = vmul.f32 %v1005, %v564
        %v1007 = vmul.f32 %v1005, %v1003
        %v1008 = vadd.f32 %v983, %v1006
        %v1009 = vadd.f32 %v984, %v1007
        %s1010 = sld [smem:[#allocation8 + $0x1d]]
        %v1011 = vstv %s1010
        %v1012 = vmul.f32 %v1011, %v564
        %v1013 = vmul.f32 %v1011, %v1003
        %v1014 = vadd.f32 %v989, %v1012
        %v1015 = vadd.f32 %v990, %v1013
        %s1016 = sld [smem:[#allocation8 + $0x31]]
        %v1017 = vstv %s1016
        %v1018 = vmul.f32 %v1017, %v564
        %v1019 = vmul.f32 %v1017, %v1003
        %v1020 = vadd.f32 %v995, %v1018
        %v1021 = vadd.f32 %v996, %v1019
        %s1022 = sld [smem:[#allocation8 + $0x45]]
        %v1023 = vstv %s1022
        %v1024 = vmul.f32 %v1023, %v564
        %v1025 = vmul.f32 %v1023, %v1003
        %v1026 = vadd.f32 %v1001, %v1024
        %v1027 = vadd.f32 %v1002, %v1025
        %v1028 = vsel %vm542, %v591, %v592
        %s1029 = sld [smem:[#allocation8 + $0xe]]
        %v1030 = vstv %s1029
        %v1031 = vmul.f32 %v1030, %v593
        %v1032 = vmul.f32 %v1030, %v1028
        %v1033 = vadd.f32 %v1008, %v1031
        %v1034 = vadd.f32 %v1009, %v1032
        %s1035 = sld [smem:[#allocation8 + $0x22]]
        %v1036 = vstv %s1035
        %v1037 = vmul.f32 %v1036, %v593
        %v1038 = vmul.f32 %v1036, %v1028
        %v1039 = vadd.f32 %v1014, %v1037
        %v1040 = vadd.f32 %v1015, %v1038
        %s1041 = sld [smem:[#allocation8 + $0x36]]
        %v1042 = vstv %s1041
        %v1043 = vmul.f32 %v1042, %v593
        %v1044 = vmul.f32 %v1042, %v1028
        %v1045 = vadd.f32 %v1020, %v1043
        %v1046 = vadd.f32 %v1021, %v1044
        %s1047 = sld [smem:[#allocation8 + $0x4a]]
        %v1048 = vstv %s1047
        %v1049 = vmul.f32 %v1048, %v593
        %v1050 = vmul.f32 %v1048, %v1028
        %v1051 = vadd.f32 %v1026, %v1049
        %v1052 = vadd.f32 %v1027, %v1050
        %v1053 = vsel %vm542, %v620, %v621
        %s1054 = sld [smem:[#allocation8 + $0x13]]
        %v1055 = vstv %s1054
        %v1056 = vmul.f32 %v1055, %v622
        %v1057 = vmul.f32 %v1055, %v1053
        %v1058 = vadd.f32 %v1033, %v1056
        %v1059 = vadd.f32 %v1034, %v1057
        %s1060 = sld [smem:[#allocation8 + $0x27]]
        %v1061 = vstv %s1060
        %v1062 = vmul.f32 %v1061, %v622
        %v1063 = vmul.f32 %v1061, %v1053
        %v1064 = vadd.f32 %v1039, %v1062
        %v1065 = vadd.f32 %v1040, %v1063
        %s1066 = sld [smem:[#allocation8 + $0x3b]]
        %v1067 = vstv %s1066
        %v1068 = vmul.f32 %v1067, %v622
        %v1069 = vmul.f32 %v1067, %v1053
        %v1070 = vadd.f32 %v1045, %v1068
        %v1071 = vadd.f32 %v1046, %v1069
        %s1072 = sld [smem:[#allocation8 + $0x4f]]
        %v1073 = vstv %s1072
        %v1074 = vmul.f32 %v1073, %v622
        %v1075 = vmul.f32 %v1073, %v1053
        %v1076 = vadd.f32 %v1051, %v1074
        %v1077 = vadd.f32 %v1052, %v1075
        %s1078 = sld [smem:[#allocation9]]
        %v1079 = vstv %s1078
        %v1080 = vadd.f32 %v1058, %v1079
        %v1081 = vadd.f32 %v1059, %v1079
        %v1082 = vxor.u32 %v1080, 2147483648
        %v1083 = vxor.u32 %v1081, 2147483648
        %v1084 = vmul.f32 %v1082, 1.442695
        %v1085 = vpow.pop %v1084
        %v1086 = vmul.f32 %v1083, 1.442695
        %v1087 = vpow.pop %v1086
        %v1088 = vadd.f32 %v1085, 1.0
        %v1089 = vadd.f32 %v1087, 1.0
        %v1090 = vrcp.pop %v1088
        %v1091 = vmul.f32 1.0, %v1090
        %v1092 = vrcp.pop %v1089
        %v1093 = vmul.f32 1.0, %v1092
        %vm1094 = vcmask 130048
        %1095 = vst.msk [vmem:[%s319] sm:$0xff] %vm1094, %v1091
        %1096 = vst.msk [vmem:[%s319 + $0x8] sm:$0xff] %vm1094, %v1093
        %s1097 = sld [smem:[#allocation9 + $0x1]]
        %v1098 = vstv %s1097
        %v1099 = vadd.f32 %v1064, %v1098
        %v1100 = vadd.f32 %v1065, %v1098
        %v1101 = vxor.u32 %v1099, 2147483648
        %v1102 = vxor.u32 %v1100, 2147483648
        %v1103 = vmul.f32 %v1101, 1.442695
        %v1104 = vpow.pop %v1103
        %v1105 = vmul.f32 %v1102, 1.442695
        %v1106 = vpow.pop %v1105
        %v1107 = vadd.f32 %v1104, 1.0
        %v1108 = vadd.f32 %v1106, 1.0
        %v1109 = vrcp.pop %v1107
        %v1110 = vmul.f32 1.0, %v1109
        %v1111 = vrcp.pop %v1108
        %v1112 = vmul.f32 1.0, %v1111
        %s1113 = scalar_lea.vmem %s319, 16 [#allocation11]
        %1114 = vst.msk [vmem:[%s1113] sm:$0xff] %vm1094, %v1110
        %1115 = vst.msk [vmem:[%s1113 + $0x8] sm:$0xff] %vm1094, %v1112
        %s1116 = sld [smem:[#allocation9 + $0x2]]
        %v1117 = vstv %s1116
        %v1118 = vadd.f32 %v1070, %v1117
        %v1119 = vadd.f32 %v1071, %v1117
        %v1120 = vxor.u32 %v1118, 2147483648
        %v1121 = vxor.u32 %v1119, 2147483648
        %v1122 = vmul.f32 %v1120, 1.442695
        %v1123 = vpow.pop %v1122
        %v1124 = vmul.f32 %v1121, 1.442695
        %v1125 = vpow.pop %v1124
        %v1126 = vadd.f32 %v1123, 1.0
        %v1127 = vadd.f32 %v1125, 1.0
        %v1128 = vrcp.pop %v1126
        %v1129 = vmul.f32 1.0, %v1128
        %v1130 = vrcp.pop %v1127
        %v1131 = vmul.f32 1.0, %v1130
        %s1132 = scalar_lea.vmem %s319, 32 [#allocation11]
        %1133 = vst.msk [vmem:[%s1132] sm:$0xff] %vm1094, %v1129
        %1134 = vst.msk [vmem:[%s1132 + $0x8] sm:$0xff] %vm1094, %v1131
        %s1135 = sld [smem:[#allocation9 + $0x3]]
        %v1136 = vstv %s1135
        %v1137 = vadd.f32 %v1076, %v1136
        %v1138 = vadd.f32 %v1077, %v1136
        %v1139 = vxor.u32 %v1137, 2147483648
        %v1140 = vxor.u32 %v1138, 2147483648
        %v1141 = vmul.f32 %v1139, 1.442695
        %v1142 = vpow.pop %v1141
        %v1143 = vmul.f32 %v1140, 1.442695
        %v1144 = vpow.pop %v1143
        %v1145 = vadd.f32 %v1142, 1.0
        %v1146 = vadd.f32 %v1144, 1.0
        %v1147 = vrcp.pop %v1145
        %v1148 = vmul.f32 1.0, %v1147
        %v1149 = vrcp.pop %v1146
        %v1150 = vmul.f32 1.0, %v1149
        %s1151 = scalar_lea.vmem %s319, 48 [#allocation11]
        %1152 = vst.msk [vmem:[%s1151] sm:$0xff] %vm1094, %v1148
        %1153 = vst.msk [vmem:[%s1151 + $0x8] sm:$0xff] %vm1094, %v1150
        %s1154 = sand.u32 %s179, 1
        %s1155 = scalar_lea.sflag [#allocation4], %s1154
        %s1156 = sand.u32 %s179, 1
        %s1157 = smul.addr %s1156, 64
        %s1158 = scalar_lea.vmem [#allocation11], %s1157
        // Predicated region
        $region61: #{tpu_custom_call.1} parent=43 // pred_check
          %p1159 = pneg %p189
        $region62: #{tpu_custom_call.1} parent=43 // pred_check_branch
          %1161 = sbr.rel (%p1159) target = $region64
        $region63: #{tpu_custom_call.1} parent=43 // pred_region
          %s1163 = ssub.s32 1024, 1024
          %1164 = vsyncadd %s1155, %s1163
          %s1165 = smul.addr %s28, 8
          %s1166 = sadd.s32 %s29, %s1165
          %s1167 = smul.addr %s1166, 128
          %s1168 = scalar_lea.hbm %s6, %s1167
          %s1169 = sshll.u32 %s1158, 4
          %s1170 = int_to_ptr.vmem [resolvable:$true] %s1169
          %1175 = dma.vmem_to_hbm [thread:$0]  %s1170, 1024, %s1168, %s1155, 128, 128, 8
        $region64: #{tpu_custom_call.1} parent=43 // pred_fallthru
          _
      $region44: #{tpu_custom_call.1} parent=5 // pred_fallthru
        _
      %p1176 = scmp.le.s32.totalorder 2, %s19
      // Predicated region
      $region65: #{tpu_custom_call.1} parent=5 // pred_check
        %p1177 = pneg %p1176
      $region66: #{tpu_custom_call.1} parent=5 // pred_check_branch
        %1179 = sbr.rel (%p1177) target = $region68
      $region67: #{tpu_custom_call.1} parent=5 // pred_region
        %s1180 = ssub.s32 %s19, 2
        // Predicated region
        $region69: #{tpu_custom_call.1} parent=67 // pred_check
          %p1181 = pneg %p195
        $region70: #{tpu_custom_call.1} parent=67 // pred_check_branch
          %1183 = sbr.rel (%p1181) target = $region72
        $region71: #{tpu_custom_call.1} parent=67 // pred_region
          %s1184 = sand.u32 %s180, 1
          %s1185 = scalar_lea.sflag [#allocation4], %s1184
          %s1186 = sand.u32 %s180, 1
          %s1187 = smul.addr %s1186, 64
          %s1188 = scalar_lea.vmem [#allocation11], %s1187
          %1189 = dma.done %s1185, 1024
        $region72: #{tpu_custom_call.1} parent=67 // pred_fallthru
          _
      $region68: #{tpu_custom_call.1} parent=5 // pred_fallthru
        _
    $region6: #{tpu_custom_call.1} parent=1 // loop_footer
      %s23 = sadd.s32 1, %s19
    $region7: #{tpu_custom_call.1} parent=1 // loop_footer_branch
      %18 = sbr.rel target = $region3
    $region8: #{tpu_custom_call.1} parent=1 // loop_exit
      _
    %1190 = vsyncpa [#allocation4], 1
    %s1191 = scalar_lea.sflag [#allocation4], 1
    %1192 = vsyncpa %s1191, 1
    %1193 = vsyncpa [#allocation5], 1
    %s1194 = scalar_lea.sflag [#allocation5], 1
    %1195 = vsyncpa %s1194, 1
    %1196 = vsyncpa [#allocation7], 1
    %1197 = vsyncpa [#allocation10], 1

</llo_original>
